<compile_context>
chip_gen: v7x
topology: tpu7x:2x2x1
jax: 0.10.0
libtpu: 0.0.40
codegen_flags: <defaults>
</compile_context>

<pallas_src>
import functools

import jax
import jax.numpy as jnp
import numpy as np
from jax import lax
from jax.experimental import pallas as pl
from jax.experimental.pallas import tpu as pltpu


def lstm_kernel(gx_ref, h0_ref, c0_ref, whT_ref, out_ref, h_scr, c_scr, *,
                hidden_size, t_block):
    """Grid = (batch_block [parallel], time_chunk [arbitrary]).

    gx_ref : (Tt, Bb, 4H) f32  pre-projected x2h(x_t) + bx + bh
    whT_ref: (H, 4H)       bf16/f32 resident recurrent weight (h2h.weight^T)
    out_ref: (Tt, Bb, H)   f32  per-step emitted state (== cy, as in the source)
    h_scr/c_scr: (Bb, H)   f32  recurrent state carried across time chunks
    """
    t_chunk = pl.program_id(1)

    # (Re)initialize the recurrent state at the start of each batch block.
    @pl.when(t_chunk == 0)
    def _():
        h_scr[...] = h0_ref[...]
        c_scr[...] = c0_ref[...]

    whT = whT_ref[...]          # read once per grid step; resident, single-buffered
    H = hidden_size

    def sigmoid(x):
        # logistic(x) == 0.5*(tanh(x/2)+1): one EUP op, no VALU divide.
        return 0.5 * (jnp.tanh(0.5 * x) + 1.0)

    def step(tt, carry):
        hidden, cell = carry                                   # f32 (Bb, H)
        # Only the recurrent h2h matmul lives in the sequential loop; x2h and
        # both biases were hoisted into gx_ref.  bf16 MXU operands, f32 accum.
        gates = gx_ref[tt] + jnp.dot(hidden.astype(whT.dtype), whT,
                                     preferred_element_type=jnp.float32)
        i_t = sigmoid(gates[:, 0 * H:1 * H])
        f_t = sigmoid(gates[:, 1 * H:2 * H])
        g_t = sigmoid(gates[:, 2 * H:3 * H])   # sigmoid (NOT tanh) — as in the source
        o_t = sigmoid(gates[:, 3 * H:4 * H])
        cy = cell * f_t + i_t * g_t
        hy = o_t * jnp.tanh(cy)                # self.nonlinearity == tanh
        out_ref[tt] = cy.astype(out_ref.dtype)  # module appends hidden[0] == cy
        # forward_pass returns (cy, hy); next step unpacks (hidden, cell) = (cy, hy).
        return cy, hy

    h, c = lax.fori_loop(0, t_block, step, (h_scr[...], c_scr[...]), unroll=True)
    h_scr[...] = h
    c_scr[...] = c


def lstm_forward(inputs, h0, c0, wx, bx, wh, bh, epsilon=0.0, *,
                 t_block=8, b_block=None, mxu_dtype=jnp.bfloat16):
    """inputs: (B, T, D) f32; h0/c0: (B, H) f32; wx:(4H,D) bx:(4H,) wh:(4H,H) bh:(4H,)."""
    B, T, D = inputs.shape
    H = h0.shape[-1]
    t_block = min(t_block, T)
    assert T % t_block == 0, "T must be a multiple of the time chunk"
    if b_block is None:
        b_block = B                      # real workloads: pick a multiple of 8 < B
    assert B % b_block == 0

    # 1) Hoist the time-parallel input projection + both biases out of the
    #    recurrence (one big matmul at full MXU utilization), time-major so the
    #    sequential kernel streams contiguous (Tt, Bb, 4H) slabs.
    bsum = (bx + bh).astype(jnp.float32)
    gates_x = jnp.einsum(
        "btd,dg->tbg", inputs.astype(jnp.float32), wx.T.astype(jnp.float32),
        precision=lax.Precision.HIGHEST,
        preferred_element_type=jnp.float32) + bsum                  # (T, B, 4H)

    # 2) Only the recurrent weight stays resident in the kernel; bf16 halves its
    #    VMEM/HBM footprint and is MXU-native (accumulation stays f32).
    whT = wh.T.astype(mxu_dtype)                                     # (H, 4H)

    nb = B // b_block
    nt = T // t_block

    kernel = functools.partial(lstm_kernel, hidden_size=H, t_block=t_block)
    single_buf = dict(pipeline_mode=pl.Buffered(1))   # don't double-buffer residents

    out_tm = pl.pallas_call(
        kernel,
        out_shape=jax.ShapeDtypeStruct((T, B, H), jnp.float32),
        grid_spec=pltpu.PrefetchScalarGridSpec(
            num_scalar_prefetch=0,
            grid=(nb, nt),                 # batch blocks (parallel), time (sequential, last)
            in_specs=[
                pl.BlockSpec((t_block, b_block, 4 * H), lambda b, t: (t, b, 0)),
                pl.BlockSpec((b_block, H), lambda b, t: (b, 0), **single_buf),   # h0
                pl.BlockSpec((b_block, H), lambda b, t: (b, 0), **single_buf),   # c0
                pl.BlockSpec((H, 4 * H), lambda b, t: (0, 0), **single_buf),     # h2h W^T
            ],
            out_specs=pl.BlockSpec((t_block, b_block, H), lambda b, t: (t, b, 0)),
            scratch_shapes=[pltpu.VMEM((b_block, H), jnp.float32),   # hidden state
                            pltpu.VMEM((b_block, H), jnp.float32)],  # cell state
        ),
        compiler_params=pltpu.CompilerParams(
            dimension_semantics=("parallel", "arbitrary"),
            vmem_limit_bytes=48 * 1024 * 1024),   # v7x-safe explicit budget
    )(gates_x, h0, c0, whT)

    hiddens = jnp.transpose(out_tm, (1, 0, 2))   # (B, T, H) == torch.permute((1,0,2))
    # TODO(synk): source adds epsilon * torch.randn_like(hidden) where `hidden` is a
    # tuple (a bug in the original); noise term skipped (epsilon defaults to 0.0).
    return None, hiddens


def lstm_reference(inputs, h0, c0, wx, bx, wh, bh):
    """Pure-JAX f32 reference reproducing the PyTorch module step-for-step."""
    B, T, D = inputs.shape
    H = h0.shape[-1]
    dot = functools.partial(jnp.dot, precision=lax.Precision.HIGHEST,
                            preferred_element_type=jnp.float32)
    hidden, cell = h0, c0
    outs = []
    for t in range(T):
        gates = dot(inputs[:, t], wx.T) + bx + dot(hidden, wh.T) + bh
        i_t = jax.nn.sigmoid(gates[:, 0 * H:1 * H])
        f_t = jax.nn.sigmoid(gates[:, 1 * H:2 * H])
        g_t = jax.nn.sigmoid(gates[:, 2 * H:3 * H])
        o_t = jax.nn.sigmoid(gates[:, 3 * H:4 * H])
        cy = cell * f_t + i_t * g_t
        hy = o_t * jnp.tanh(cy)
        outs.append(cy)
        hidden, cell = cy, hy            # swapped roles, as in the source
    return jnp.stack(outs, axis=1)       # (B, T, H)


if __name__ == "__main__":
    # H multiple of 128 -> lane-aligned gate slices; T=16 with t_block=8 exercises
    # the state carry across grid steps (two time chunks).
    B, T, D, H = 2, 16, 16, 128

    key = jax.random.PRNGKey(0)
    kx, kh0, kc0, kwx, kbx, kwh, kbh = jax.random.split(key, 7)

    inputs = jax.random.normal(kx, (B, T, D), dtype=jnp.float32)
    h0 = jax.random.normal(kh0, (B, H), dtype=jnp.float32)
    c0 = jax.random.normal(kc0, (B, H), dtype=jnp.float32)

    # nn.Linear-style deterministic init: U(-1/sqrt(in), 1/sqrt(in)).
    bnd_x = 1.0 / np.sqrt(D)
    bnd_h = 1.0 / np.sqrt(H)
    wx = jax.random.uniform(kwx, (4 * H, D), jnp.float32, -bnd_x, bnd_x)
    bx = jax.random.uniform(kbx, (4 * H,), jnp.float32, -bnd_x, bnd_x)
    wh = jax.random.uniform(kwh, (4 * H, H), jnp.float32, -bnd_h, bnd_h)
    bh = jax.random.uniform(kbh, (4 * H,), jnp.float32, -bnd_h, bnd_h)

    ref = lstm_reference(inputs, h0, c0, wx, bx, wh, bh)

    # f32-MXU path: tight check of the kernel/recurrence plumbing.
    _, hid_f32 = lstm_forward(inputs, h0, c0, wx, bx, wh, bh,
                              mxu_dtype=jnp.float32)
    hid_f32 = jax.block_until_ready(hid_f32)
    np.testing.assert_allclose(np.asarray(hid_f32), np.asarray(ref),
                               rtol=1e-4, atol=1e-4)

    # bf16-MXU path (default, optimized): loosened tolerance for bf16 h2h operands.
    _, hid_bf16 = lstm_forward(inputs, h0, c0, wx, bx, wh, bh)
    hid_bf16 = jax.block_until_ready(hid_bf16)
    np.testing.assert_allclose(np.asarray(hid_bf16), np.asarray(ref),
                               rtol=5e-2, atol=5e-2)

    assert hid_bf16.shape == (B, T, H)
    print("KERNEL_OK")
</pallas_src>

<mosaic_0001>
module attributes {stable_mosaic.version = 11 : i64} {
  func.func @lstm_kernel(%arg0: i32, %arg1: i32, %arg2: memref<8x2x512xf32, #tpu.memory_space<vmem>>, %arg3: memref<2x128xf32, #tpu.memory_space<vmem>>, %arg4: memref<2x128xf32, #tpu.memory_space<vmem>>, %arg5: memref<128x512xf32, #tpu.memory_space<vmem>>, %arg6: memref<8x2x128xf32, #tpu.memory_space<vmem>>, %arg7: memref<2x128xf32, #tpu.memory_space<vmem>>, %arg8: memref<2x128xf32, #tpu.memory_space<vmem>>) attributes {dimension_semantics = [#tpu.dimension_semantics<parallel>, #tpu.dimension_semantics<arbitrary>], iteration_bounds = array<i64: 1, 2>, scalar_prefetch = 0 : i64, scratch_operands = 2 : i64, tpu.core_type = #tpu.core_type<tc>, window_params = [{transform_indices = @transform_0, window_bounds = array<i64: 8, 2, 512>}, {pipeline_mode = #tpu.pipeline_mode<synchronous>, transform_indices = @transform_1, window_bounds = array<i64: 2, 128>}, {pipeline_mode = #tpu.pipeline_mode<synchronous>, transform_indices = @transform_2, window_bounds = array<i64: 2, 128>}, {pipeline_mode = #tpu.pipeline_mode<synchronous>, transform_indices = @transform_3, window_bounds = array<i64: 128, 512>}, {transform_indices = @transform_4, window_bounds = array<i64: 8, 2, 128>}]} {
    %c0_i32 = arith.constant 0 : i32
    %0 = arith.cmpi eq, %arg1, %c0_i32 : i32
    %1 = arith.extui %0 : i1 to i32
    %c0_i32_0 = arith.constant 0 : i32
    %2 = arith.cmpi ne, %1, %c0_i32_0 : i32
    scf.if %2 {
      %c0_146 = arith.constant 0 : index
      %c0_147 = arith.constant 0 : index
      %376 = vector.load %arg3[%c0_146, %c0_147] : memref<2x128xf32, #tpu.memory_space<vmem>>, vector<2x128xf32>
      %c0_148 = arith.constant 0 : index
      %c0_149 = arith.constant 0 : index
      %377 = vector.load %arg7[%c0_148, %c0_149] : memref<2x128xf32, #tpu.memory_space<vmem>>, vector<2x128xf32>
      tpu.vector_store %arg7[%c0_148, %c0_149], %376 {strides = array<i32>} : memref<2x128xf32, #tpu.memory_space<vmem>>, vector<2x128xf32>,
      %c0_150 = arith.constant 0 : index
      %c0_151 = arith.constant 0 : index
      %378 = vector.load %arg4[%c0_150, %c0_151] : memref<2x128xf32, #tpu.memory_space<vmem>>, vector<2x128xf32>
      %c0_152 = arith.constant 0 : index
      %c0_153 = arith.constant 0 : index
      %379 = vector.load %arg8[%c0_152, %c0_153] : memref<2x128xf32, #tpu.memory_space<vmem>>, vector<2x128xf32>
      tpu.vector_store %arg8[%c0_152, %c0_153], %378 {strides = array<i32>} : memref<2x128xf32, #tpu.memory_space<vmem>>, vector<2x128xf32>,
    } else {
    }
    %c0 = arith.constant 0 : index
    %c0_1 = arith.constant 0 : index
    %3 = vector.load %arg5[%c0, %c0_1] : memref<128x512xf32, #tpu.memory_space<vmem>>, vector<128x512xf32>
    %c0_2 = arith.constant 0 : index
    %c0_3 = arith.constant 0 : index
    %4 = vector.load %arg7[%c0_2, %c0_3] : memref<2x128xf32, #tpu.memory_space<vmem>>, vector<2x128xf32>
    %c0_4 = arith.constant 0 : index
    %c0_5 = arith.constant 0 : index
    %5 = vector.load %arg8[%c0_4, %c0_5] : memref<2x128xf32, #tpu.memory_space<vmem>>, vector<2x128xf32>
    %c0_i32_6 = arith.constant 0 : i32
    %6 = arith.index_cast %c0_i32_6 : i32 to index
    %c0_7 = arith.constant 0 : index
    %c0_8 = arith.constant 0 : index
    %7 = vector.load %arg2[%6, %c0_7, %c0_8] : memref<8x2x512xf32, #tpu.memory_space<vmem>>, vector<1x2x512xf32>
    %8 = vector.shape_cast %7 : vector<1x2x512xf32> to vector<2x512xf32>
    %cst = arith.constant dense<0.000000e+00> : vector<2x512xf32>
    %9 = tpu.matmul %4, %3, %cst {dimension_numbers = #tpu.dot_dimension_numbers<[1], [0], [0], [1], [0, 0, 1, 1], [], []>} : vector<2x128xf32>, vector<128x512xf32>, vector<2x512xf32> -> vector<2x512xf32>
    %10 = arith.addf %8, %9 : vector<2x512xf32>
    %11 = vector.extract_strided_slice %10 {offsets = [0, 0], sizes = [2, 128], strides = [1, 1]} : vector<2x512xf32> to vector<2x128xf32>
    %cst_9 = arith.constant 5.000000e-01 : f32
    %12 = vector.broadcast %cst_9 : f32 to vector<2x128xf32>
    %13 = arith.mulf %12, %11 : vector<2x128xf32>
    %14 = math.tanh %13 : vector<2x128xf32>
    %cst_10 = arith.constant 1.000000e+00 : f32
    %15 = vector.broadcast %cst_10 : f32 to vector<2x128xf32>
    %16 = arith.addf %14, %15 : vector<2x128xf32>
    %cst_11 = arith.constant 5.000000e-01 : f32
    %17 = vector.broadcast %cst_11 : f32 to vector<2x128xf32>
    %18 = arith.mulf %17, %16 : vector<2x128xf32>
    %19 = vector.extract_strided_slice %10 {offsets = [0, 128], sizes = [2, 128], strides = [1, 1]} : vector<2x512xf32> to vector<2x128xf32>
    %cst_12 = arith.constant 5.000000e-01 : f32
    %20 = vector.broadcast %cst_12 : f32 to vector<2x128xf32>
    %21 = arith.mulf %20, %19 : vector<2x128xf32>
    %22 = math.tanh %21 : vector<2x128xf32>
    %cst_13 = arith.constant 1.000000e+00 : f32
    %23 = vector.broadcast %cst_13 : f32 to vector<2x128xf32>
    %24 = arith.addf %22, %23 : vector<2x128xf32>
    %cst_14 = arith.constant 5.000000e-01 : f32
    %25 = vector.broadcast %cst_14 : f32 to vector<2x128xf32>
    %26 = arith.mulf %25, %24 : vector<2x128xf32>
    %27 = vector.extract_strided_slice %10 {offsets = [0, 256], sizes = [2, 128], strides = [1, 1]} : vector<2x512xf32> to vector<2x128xf32>
    %cst_15 = arith.constant 5.000000e-01 : f32
    %28 = vector.broadcast %cst_15 : f32 to vector<2x128xf32>
    %29 = arith.mulf %28, %27 : vector<2x128xf32>
    %30 = math.tanh %29 : vector<2x128xf32>
    %cst_16 = arith.constant 1.000000e+00 : f32
    %31 = vector.broadcast %cst_16 : f32 to vector<2x128xf32>
    %32 = arith.addf %30, %31 : vector<2x128xf32>
    %cst_17 = arith.constant 5.000000e-01 : f32
    %33 = vector.broadcast %cst_17 : f32 to vector<2x128xf32>
    %34 = arith.mulf %33, %32 : vector<2x128xf32>
    %35 = vector.extract_strided_slice %10 {offsets = [0, 384], sizes = [2, 128], strides = [1, 1]} : vector<2x512xf32> to vector<2x128xf32>
    %cst_18 = arith.constant 5.000000e-01 : f32
    %36 = vector.broadcast %cst_18 : f32 to vector<2x128xf32>
    %37 = arith.mulf %36, %35 : vector<2x128xf32>
    %38 = math.tanh %37 : vector<2x128xf32>
    %cst_19 = arith.constant 1.000000e+00 : f32
    %39 = vector.broadcast %cst_19 : f32 to vector<2x128xf32>
    %40 = arith.addf %38, %39 : vector<2x128xf32>
    %cst_20 = arith.constant 5.000000e-01 : f32
    %41 = vector.broadcast %cst_20 : f32 to vector<2x128xf32>
    %42 = arith.mulf %41, %40 : vector<2x128xf32>
    %43 = arith.mulf %5, %26 : vector<2x128xf32>
    %44 = arith.mulf %18, %34 : vector<2x128xf32>
    %45 = arith.addf %43, %44 : vector<2x128xf32>
    %46 = math.tanh %45 : vector<2x128xf32>
    %47 = arith.mulf %42, %46 : vector<2x128xf32>
    %48 = arith.index_cast %c0_i32_6 : i32 to index
    %c0_21 = arith.constant 0 : index
    %c0_22 = arith.constant 0 : index
    %49 = vector.load %arg6[%48, %c0_21, %c0_22] : memref<8x2x128xf32, #tpu.memory_space<vmem>>, vector<1x2x128xf32>
    %50 = vector.shape_cast %49 : vector<1x2x128xf32> to vector<2x128xf32>
    %51 = vector.shape_cast %45 : vector<2x128xf32> to vector<1x2x128xf32>
    tpu.vector_store %arg6[%48, %c0_21, %c0_22], %51 {strides = array<i32>} : memref<8x2x128xf32, #tpu.memory_space<vmem>>, vector<1x2x128xf32>,
    %c1_i32 = arith.constant 1 : i32
    %52 = arith.index_cast %c1_i32 : i32 to index
    %c0_23 = arith.constant 0 : index
    %c0_24 = arith.constant 0 : index
    %53 = vector.load %arg2[%52, %c0_23, %c0_24] : memref<8x2x512xf32, #tpu.memory_space<vmem>>, vector<1x2x512xf32>
    %54 = vector.shape_cast %53 : vector<1x2x512xf32> to vector<2x512xf32>
    %cst_25 = arith.constant dense<0.000000e+00> : vector<2x512xf32>
    %55 = tpu.matmul %45, %3, %cst_25 {dimension_numbers = #tpu.dot_dimension_numbers<[1], [0], [0], [1], [0, 0, 1, 1], [], []>} : vector<2x128xf32>, vector<128x512xf32>, vector<2x512xf32> -> vector<2x512xf32>
    %56 = arith.addf %54, %55 : vector<2x512xf32>
    %57 = vector.extract_strided_slice %56 {offsets = [0, 0], sizes = [2, 128], strides = [1, 1]} : vector<2x512xf32> to vector<2x128xf32>
    %cst_26 = arith.constant 5.000000e-01 : f32
    %58 = vector.broadcast %cst_26 : f32 to vector<2x128xf32>
    %59 = arith.mulf %58, %57 : vector<2x128xf32>
    %60 = math.tanh %59 : vector<2x128xf32>
    %cst_27 = arith.constant 1.000000e+00 : f32
    %61 = vector.broadcast %cst_27 : f32 to vector<2x128xf32>
    %62 = arith.addf %60, %61 : vector<2x128xf32>
    %cst_28 = arith.constant 5.000000e-01 : f32
    %63 = vector.broadcast %cst_28 : f32 to vector<2x128xf32>
    %64 = arith.mulf %63, %62 : vector<2x128xf32>
    %65 = vector.extract_strided_slice %56 {offsets = [0, 128], sizes = [2, 128], strides = [1, 1]} : vector<2x512xf32> to vector<2x128xf32>
    %cst_29 = arith.constant 5.000000e-01 : f32
    %66 = vector.broadcast %cst_29 : f32 to vector<2x128xf32>
    %67 = arith.mulf %66, %65 : vector<2x128xf32>
    %68 = math.tanh %67 : vector<2x128xf32>
    %cst_30 = arith.constant 1.000000e+00 : f32
    %69 = vector.broadcast %cst_30 : f32 to vector<2x128xf32>
    %70 = arith.addf %68, %69 : vector<2x128xf32>
    %cst_31 = arith.constant 5.000000e-01 : f32
    %71 = vector.broadcast %cst_31 : f32 to vector<2x128xf32>
    %72 = arith.mulf %71, %70 : vector<2x128xf32>
    %73 = vector.extract_strided_slice %56 {offsets = [0, 256], sizes = [2, 128], strides = [1, 1]} : vector<2x512xf32> to vector<2x128xf32>
    %cst_32 = arith.constant 5.000000e-01 : f32
    %74 = vector.broadcast %cst_32 : f32 to vector<2x128xf32>
    %75 = arith.mulf %74, %73 : vector<2x128xf32>
    %76 = math.tanh %75 : vector<2x128xf32>
    %cst_33 = arith.constant 1.000000e+00 : f32
    %77 = vector.broadcast %cst_33 : f32 to vector<2x128xf32>
    %78 = arith.addf %76, %77 : vector<2x128xf32>
    %cst_34 = arith.constant 5.000000e-01 : f32
    %79 = vector.broadcast %cst_34 : f32 to vector<2x128xf32>
    %80 = arith.mulf %79, %78 : vector<2x128xf32>
    %81 = vector.extract_strided_slice %56 {offsets = [0, 384], sizes = [2, 128], strides = [1, 1]} : vector<2x512xf32> to vector<2x128xf32>
    %cst_35 = arith.constant 5.000000e-01 : f32
    %82 = vector.broadcast %cst_35 : f32 to vector<2x128xf32>
    %83 = arith.mulf %82, %81 : vector<2x128xf32>
    %84 = math.tanh %83 : vector<2x128xf32>
    %cst_36 = arith.constant 1.000000e+00 : f32
    %85 = vector.broadcast %cst_36 : f32 to vector<2x128xf32>
    %86 = arith.addf %84, %85 : vector<2x128xf32>
    %cst_37 = arith.constant 5.000000e-01 : f32
    %87 = vector.broadcast %cst_37 : f32 to vector<2x128xf32>
    %88 = arith.mulf %87, %86 : vector<2x128xf32>
    %89 = arith.mulf %47, %72 : vector<2x128xf32>
    %90 = arith.mulf %64, %80 : vector<2x128xf32>
    %91 = arith.addf %89, %90 : vector<2x128xf32>
    %92 = math.tanh %91 : vector<2x128xf32>
    %93 = arith.mulf %88, %92 : vector<2x128xf32>
    %94 = arith.index_cast %c1_i32 : i32 to index
    %c0_38 = arith.constant 0 : index
    %c0_39 = arith.constant 0 : index
    %95 = vector.load %arg6[%94, %c0_38, %c0_39] : memref<8x2x128xf32, #tpu.memory_space<vmem>>, vector<1x2x128xf32>
    %96 = vector.shape_cast %95 : vector<1x2x128xf32> to vector<2x128xf32>
    %97 = vector.shape_cast %91 : vector<2x128xf32> to vector<1x2x128xf32>
    tpu.vector_store %arg6[%94, %c0_38, %c0_39], %97 {strides = array<i32>} : memref<8x2x128xf32, #tpu.memory_space<vmem>>, vector<1x2x128xf32>,
    %c2_i32 = arith.constant 2 : i32
    %98 = arith.index_cast %c2_i32 : i32 to index
    %c0_40 = arith.constant 0 : index
    %c0_41 = arith.constant 0 : index
    %99 = vector.load %arg2[%98, %c0_40, %c0_41] : memref<8x2x512xf32, #tpu.memory_space<vmem>>, vector<1x2x512xf32>
    %100 = vector.shape_cast %99 : vector<1x2x512xf32> to vector<2x512xf32>
    %cst_42 = arith.constant dense<0.000000e+00> : vector<2x512xf32>
    %101 = tpu.matmul %91, %3, %cst_42 {dimension_numbers = #tpu.dot_dimension_numbers<[1], [0], [0], [1], [0, 0, 1, 1], [], []>} : vector<2x128xf32>, vector<128x512xf32>, vector<2x512xf32> -> vector<2x512xf32>
    %102 = arith.addf %100, %101 : vector<2x512xf32>
    %103 = vector.extract_strided_slice %102 {offsets = [0, 0], sizes = [2, 128], strides = [1, 1]} : vector<2x512xf32> to vector<2x128xf32>
    %cst_43 = arith.constant 5.000000e-01 : f32
    %104 = vector.broadcast %cst_43 : f32 to vector<2x128xf32>
    %105 = arith.mulf %104, %103 : vector<2x128xf32>
    %106 = math.tanh %105 : vector<2x128xf32>
    %cst_44 = arith.constant 1.000000e+00 : f32
    %107 = vector.broadcast %cst_44 : f32 to vector<2x128xf32>
    %108 = arith.addf %106, %107 : vector<2x128xf32>
    %cst_45 = arith.constant 5.000000e-01 : f32
    %109 = vector.broadcast %cst_45 : f32 to vector<2x128xf32>
    %110 = arith.mulf %109, %108 : vector<2x128xf32>
    %111 = vector.extract_strided_slice %102 {offsets = [0, 128], sizes = [2, 128], strides = [1, 1]} : vector<2x512xf32> to vector<2x128xf32>
    %cst_46 = arith.constant 5.000000e-01 : f32
    %112 = vector.broadcast %cst_46 : f32 to vector<2x128xf32>
    %113 = arith.mulf %112, %111 : vector<2x128xf32>
    %114 = math.tanh %113 : vector<2x128xf32>
    %cst_47 = arith.constant 1.000000e+00 : f32
    %115 = vector.broadcast %cst_47 : f32 to vector<2x128xf32>
    %116 = arith.addf %114, %115 : vector<2x128xf32>
    %cst_48 = arith.constant 5.000000e-01 : f32
    %117 = vector.broadcast %cst_48 : f32 to vector<2x128xf32>
    %118 = arith.mulf %117, %116 : vector<2x128xf32>
    %119 = vector.extract_strided_slice %102 {offsets = [0, 256], sizes = [2, 128], strides = [1, 1]} : vector<2x512xf32> to vector<2x128xf32>
    %cst_49 = arith.constant 5.000000e-01 : f32
    %120 = vector.broadcast %cst_49 : f32 to vector<2x128xf32>
    %121 = arith.mulf %120, %119 : vector<2x128xf32>
    %122 = math.tanh %121 : vector<2x128xf32>
    %cst_50 = arith.constant 1.000000e+00 : f32
    %123 = vector.broadcast %cst_50 : f32 to vector<2x128xf32>
    %124 = arith.addf %122, %123 : vector<2x128xf32>
    %cst_51 = arith.constant 5.000000e-01 : f32
    %125 = vector.broadcast %cst_51 : f32 to vector<2x128xf32>
    %126 = arith.mulf %125, %124 : vector<2x128xf32>
    %127 = vector.extract_strided_slice %102 {offsets = [0, 384], sizes = [2, 128], strides = [1, 1]} : vector<2x512xf32> to vector<2x128xf32>
    %cst_52 = arith.constant 5.000000e-01 : f32
    %128 = vector.broadcast %cst_52 : f32 to vector<2x128xf32>
    %129 = arith.mulf %128, %127 : vector<2x128xf32>
    %130 = math.tanh %129 : vector<2x128xf32>
    %cst_53 = arith.constant 1.000000e+00 : f32
    %131 = vector.broadcast %cst_53 : f32 to vector<2x128xf32>
    %132 = arith.addf %130, %131 : vector<2x128xf32>
    %cst_54 = arith.constant 5.000000e-01 : f32
    %133 = vector.broadcast %cst_54 : f32 to vector<2x128xf32>
    %134 = arith.mulf %133, %132 : vector<2x128xf32>
    %135 = arith.mulf %93, %118 : vector<2x128xf32>
    %136 = arith.mulf %110, %126 : vector<2x128xf32>
    %137 = arith.addf %135, %136 : vector<2x128xf32>
    %138 = math.tanh %137 : vector<2x128xf32>
    %139 = arith.mulf %134, %138 : vector<2x128xf32>
    %140 = arith.index_cast %c2_i32 : i32 to index
    %c0_55 = arith.constant 0 : index
    %c0_56 = arith.constant 0 : index
    %141 = vector.load %arg6[%140, %c0_55, %c0_56] : memref<8x2x128xf32, #tpu.memory_space<vmem>>, vector<1x2x128xf32>
    %142 = vector.shape_cast %141 : vector<1x2x128xf32> to vector<2x128xf32>
    %143 = vector.shape_cast %137 : vector<2x128xf32> to vector<1x2x128xf32>
    tpu.vector_store %arg6[%140, %c0_55, %c0_56], %143 {strides = array<i32>} : memref<8x2x128xf32, #tpu.memory_space<vmem>>, vector<1x2x128xf32>,
    %c3_i32 = arith.constant 3 : i32
    %144 = arith.index_cast %c3_i32 : i32 to index
    %c0_57 = arith.constant 0 : index
    %c0_58 = arith.constant 0 : index
    %145 = vector.load %arg2[%144, %c0_57, %c0_58] : memref<8x2x512xf32, #tpu.memory_space<vmem>>, vector<1x2x512xf32>
    %146 = vector.shape_cast %145 : vector<1x2x512xf32> to vector<2x512xf32>
    %cst_59 = arith.constant dense<0.000000e+00> : vector<2x512xf32>
    %147 = tpu.matmul %137, %3, %cst_59 {dimension_numbers = #tpu.dot_dimension_numbers<[1], [0], [0], [1], [0, 0, 1, 1], [], []>} : vector<2x128xf32>, vector<128x512xf32>, vector<2x512xf32> -> vector<2x512xf32>
    %148 = arith.addf %146, %147 : vector<2x512xf32>
    %149 = vector.extract_strided_slice %148 {offsets = [0, 0], sizes = [2, 128], strides = [1, 1]} : vector<2x512xf32> to vector<2x128xf32>
    %cst_60 = arith.constant 5.000000e-01 : f32
    %150 = vector.broadcast %cst_60 : f32 to vector<2x128xf32>
    %151 = arith.mulf %150, %149 : vector<2x128xf32>
    %152 = math.tanh %151 : vector<2x128xf32>
    %cst_61 = arith.constant 1.000000e+00 : f32
    %153 = vector.broadcast %cst_61 : f32 to vector<2x128xf32>
    %154 = arith.addf %152, %153 : vector<2x128xf32>
    %cst_62 = arith.constant 5.000000e-01 : f32
    %155 = vector.broadcast %cst_62 : f32 to vector<2x128xf32>
    %156 = arith.mulf %155, %154 : vector<2x128xf32>
    %157 = vector.extract_strided_slice %148 {offsets = [0, 128], sizes = [2, 128], strides = [1, 1]} : vector<2x512xf32> to vector<2x128xf32>
    %cst_63 = arith.constant 5.000000e-01 : f32
    %158 = vector.broadcast %cst_63 : f32 to vector<2x128xf32>
    %159 = arith.mulf %158, %157 : vector<2x128xf32>
    %160 = math.tanh %159 : vector<2x128xf32>
    %cst_64 = arith.constant 1.000000e+00 : f32
    %161 = vector.broadcast %cst_64 : f32 to vector<2x128xf32>
    %162 = arith.addf %160, %161 : vector<2x128xf32>
    %cst_65 = arith.constant 5.000000e-01 : f32
    %163 = vector.broadcast %cst_65 : f32 to vector<2x128xf32>
    %164 = arith.mulf %163, %162 : vector<2x128xf32>
    %165 = vector.extract_strided_slice %148 {offsets = [0, 256], sizes = [2, 128], strides = [1, 1]} : vector<2x512xf32> to vector<2x128xf32>
    %cst_66 = arith.constant 5.000000e-01 : f32
    %166 = vector.broadcast %cst_66 : f32 to vector<2x128xf32>
    %167 = arith.mulf %166, %165 : vector<2x128xf32>
    %168 = math.tanh %167 : vector<2x128xf32>
    %cst_67 = arith.constant 1.000000e+00 : f32
    %169 = vector.broadcast %cst_67 : f32 to vector<2x128xf32>
    %170 = arith.addf %168, %169 : vector<2x128xf32>
    %cst_68 = arith.constant 5.000000e-01 : f32
    %171 = vector.broadcast %cst_68 : f32 to vector<2x128xf32>
    %172 = arith.mulf %171, %170 : vector<2x128xf32>
    %173 = vector.extract_strided_slice %148 {offsets = [0, 384], sizes = [2, 128], strides = [1, 1]} : vector<2x512xf32> to vector<2x128xf32>
    %cst_69 = arith.constant 5.000000e-01 : f32
    %174 = vector.broadcast %cst_69 : f32 to vector<2x128xf32>
    %175 = arith.mulf %174, %173 : vector<2x128xf32>
    %176 = math.tanh %175 : vector<2x128xf32>
    %cst_70 = arith.constant 1.000000e+00 : f32
    %177 = vector.broadcast %cst_70 : f32 to vector<2x128xf32>
    %178 = arith.addf %176, %177 : vector<2x128xf32>
    %cst_71 = arith.constant 5.000000e-01 : f32
    %179 = vector.broadcast %cst_71 : f32 to vector<2x128xf32>
    %180 = arith.mulf %179, %178 : vector<2x128xf32>
    %181 = arith.mulf %139, %164 : vector<2x128xf32>
    %182 = arith.mulf %156, %172 : vector<2x128xf32>
    %183 = arith.addf %181, %182 : vector<2x128xf32>
    %184 = math.tanh %183 : vector<2x128xf32>
    %185 = arith.mulf %180, %184 : vector<2x128xf32>
    %186 = arith.index_cast %c3_i32 : i32 to index
    %c0_72 = arith.constant 0 : index
    %c0_73 = arith.constant 0 : index
    %187 = vector.load %arg6[%186, %c0_72, %c0_73] : memref<8x2x128xf32, #tpu.memory_space<vmem>>, vector<1x2x128xf32>
    %188 = vector.shape_cast %187 : vector<1x2x128xf32> to vector<2x128xf32>
    %189 = vector.shape_cast %183 : vector<2x128xf32> to vector<1x2x128xf32>
    tpu.vector_store %arg6[%186, %c0_72, %c0_73], %189 {strides = array<i32>} : memref<8x2x128xf32, #tpu.memory_space<vmem>>, vector<1x2x128xf32>,
    %c4_i32 = arith.constant 4 : i32
    %190 = arith.index_cast %c4_i32 : i32 to index
    %c0_74 = arith.constant 0 : index
    %c0_75 = arith.constant 0 : index
    %191 = vector.load %arg2[%190, %c0_74, %c0_75] : memref<8x2x512xf32, #tpu.memory_space<vmem>>, vector<1x2x512xf32>
    %192 = vector.shape_cast %191 : vector<1x2x512xf32> to vector<2x512xf32>
    %cst_76 = arith.constant dense<0.000000e+00> : vector<2x512xf32>
    %193 = tpu.matmul %183, %3, %cst_76 {dimension_numbers = #tpu.dot_dimension_numbers<[1], [0], [0], [1], [0, 0, 1, 1], [], []>} : vector<2x128xf32>, vector<128x512xf32>, vector<2x512xf32> -> vector<2x512xf32>
    %194 = arith.addf %192, %193 : vector<2x512xf32>
    %195 = vector.extract_strided_slice %194 {offsets = [0, 0], sizes = [2, 128], strides = [1, 1]} : vector<2x512xf32> to vector<2x128xf32>
    %cst_77 = arith.constant 5.000000e-01 : f32
    %196 = vector.broadcast %cst_77 : f32 to vector<2x128xf32>
    %197 = arith.mulf %196, %195 : vector<2x128xf32>
    %198 = math.tanh %197 : vector<2x128xf32>
    %cst_78 = arith.constant 1.000000e+00 : f32
    %199 = vector.broadcast %cst_78 : f32 to vector<2x128xf32>
    %200 = arith.addf %198, %199 : vector<2x128xf32>
    %cst_79 = arith.constant 5.000000e-01 : f32
    %201 = vector.broadcast %cst_79 : f32 to vector<2x128xf32>
    %202 = arith.mulf %201, %200 : vector<2x128xf32>
    %203 = vector.extract_strided_slice %194 {offsets = [0, 128], sizes = [2, 128], strides = [1, 1]} : vector<2x512xf32> to vector<2x128xf32>
    %cst_80 = arith.constant 5.000000e-01 : f32
    %204 = vector.broadcast %cst_80 : f32 to vector<2x128xf32>
    %205 = arith.mulf %204, %203 : vector<2x128xf32>
    %206 = math.tanh %205 : vector<2x128xf32>
    %cst_81 = arith.constant 1.000000e+00 : f32
    %207 = vector.broadcast %cst_81 : f32 to vector<2x128xf32>
    %208 = arith.addf %206, %207 : vector<2x128xf32>
    %cst_82 = arith.constant 5.000000e-01 : f32
    %209 = vector.broadcast %cst_82 : f32 to vector<2x128xf32>
    %210 = arith.mulf %209, %208 : vector<2x128xf32>
    %211 = vector.extract_strided_slice %194 {offsets = [0, 256], sizes = [2, 128], strides = [1, 1]} : vector<2x512xf32> to vector<2x128xf32>
    %cst_83 = arith.constant 5.000000e-01 : f32
    %212 = vector.broadcast %cst_83 : f32 to vector<2x128xf32>
    %213 = arith.mulf %212, %211 : vector<2x128xf32>
    %214 = math.tanh %213 : vector<2x128xf32>
    %cst_84 = arith.constant 1.000000e+00 : f32
    %215 = vector.broadcast %cst_84 : f32 to vector<2x128xf32>
    %216 = arith.addf %214, %215 : vector<2x128xf32>
    %cst_85 = arith.constant 5.000000e-01 : f32
    %217 = vector.broadcast %cst_85 : f32 to vector<2x128xf32>
    %218 = arith.mulf %217, %216 : vector<2x128xf32>
    %219 = vector.extract_strided_slice %194 {offsets = [0, 384], sizes = [2, 128], strides = [1, 1]} : vector<2x512xf32> to vector<2x128xf32>
    %cst_86 = arith.constant 5.000000e-01 : f32
    %220 = vector.broadcast %cst_86 : f32 to vector<2x128xf32>
    %221 = arith.mulf %220, %219 : vector<2x128xf32>
    %222 = math.tanh %221 : vector<2x128xf32>
    %cst_87 = arith.constant 1.000000e+00 : f32
    %223 = vector.broadcast %cst_87 : f32 to vector<2x128xf32>
    %224 = arith.addf %222, %223 : vector<2x128xf32>
    %cst_88 = arith.constant 5.000000e-01 : f32
    %225 = vector.broadcast %cst_88 : f32 to vector<2x128xf32>
    %226 = arith.mulf %225, %224 : vector<2x128xf32>
    %227 = arith.mulf %185, %210 : vector<2x128xf32>
    %228 = arith.mulf %202, %218 : vector<2x128xf32>
    %229 = arith.addf %227, %228 : vector<2x128xf32>
    %230 = math.tanh %229 : vector<2x128xf32>
    %231 = arith.mulf %226, %230 : vector<2x128xf32>
    %232 = arith.index_cast %c4_i32 : i32 to index
    %c0_89 = arith.constant 0 : index
    %c0_90 = arith.constant 0 : index
    %233 = vector.load %arg6[%232, %c0_89, %c0_90] : memref<8x2x128xf32, #tpu.memory_space<vmem>>, vector<1x2x128xf32>
    %234 = vector.shape_cast %233 : vector<1x2x128xf32> to vector<2x128xf32>
    %235 = vector.shape_cast %229 : vector<2x128xf32> to vector<1x2x128xf32>
    tpu.vector_store %arg6[%232, %c0_89, %c0_90], %235 {strides = array<i32>} : memref<8x2x128xf32, #tpu.memory_space<vmem>>, vector<1x2x128xf32>,
    %c5_i32 = arith.constant 5 : i32
    %236 = arith.index_cast %c5_i32 : i32 to index
    %c0_91 = arith.constant 0 : index
    %c0_92 = arith.constant 0 : index
    %237 = vector.load %arg2[%236, %c0_91, %c0_92] : memref<8x2x512xf32, #tpu.memory_space<vmem>>, vector<1x2x512xf32>
    %238 = vector.shape_cast %237 : vector<1x2x512xf32> to vector<2x512xf32>
    %cst_93 = arith.constant dense<0.000000e+00> : vector<2x512xf32>
    %239 = tpu.matmul %229, %3, %cst_93 {dimension_numbers = #tpu.dot_dimension_numbers<[1], [0], [0], [1], [0, 0, 1, 1], [], []>} : vector<2x128xf32>, vector<128x512xf32>, vector<2x512xf32> -> vector<2x512xf32>
    %240 = arith.addf %238, %239 : vector<2x512xf32>
    %241 = vector.extract_strided_slice %240 {offsets = [0, 0], sizes = [2, 128], strides = [1, 1]} : vector<2x512xf32> to vector<2x128xf32>
    %cst_94 = arith.constant 5.000000e-01 : f32
    %242 = vector.broadcast %cst_94 : f32 to vector<2x128xf32>
    %243 = arith.mulf %242, %241 : vector<2x128xf32>
    %244 = math.tanh %243 : vector<2x128xf32>
    %cst_95 = arith.constant 1.000000e+00 : f32
    %245 = vector.broadcast %cst_95 : f32 to vector<2x128xf32>
    %246 = arith.addf %244, %245 : vector<2x128xf32>
    %cst_96 = arith.constant 5.000000e-01 : f32
    %247 = vector.broadcast %cst_96 : f32 to vector<2x128xf32>
    %248 = arith.mulf %247, %246 : vector<2x128xf32>
    %249 = vector.extract_strided_slice %240 {offsets = [0, 128], sizes = [2, 128], strides = [1, 1]} : vector<2x512xf32> to vector<2x128xf32>
    %cst_97 = arith.constant 5.000000e-01 : f32
    %250 = vector.broadcast %cst_97 : f32 to vector<2x128xf32>
    %251 = arith.mulf %250, %249 : vector<2x128xf32>
    %252 = math.tanh %251 : vector<2x128xf32>
    %cst_98 = arith.constant 1.000000e+00 : f32
    %253 = vector.broadcast %cst_98 : f32 to vector<2x128xf32>
    %254 = arith.addf %252, %253 : vector<2x128xf32>
    %cst_99 = arith.constant 5.000000e-01 : f32
    %255 = vector.broadcast %cst_99 : f32 to vector<2x128xf32>
    %256 = arith.mulf %255, %254 : vector<2x128xf32>
    %257 = vector.extract_strided_slice %240 {offsets = [0, 256], sizes = [2, 128], strides = [1, 1]} : vector<2x512xf32> to vector<2x128xf32>
    %cst_100 = arith.constant 5.000000e-01 : f32
    %258 = vector.broadcast %cst_100 : f32 to vector<2x128xf32>
    %259 = arith.mulf %258, %257 : vector<2x128xf32>
    %260 = math.tanh %259 : vector<2x128xf32>
    %cst_101 = arith.constant 1.000000e+00 : f32
    %261 = vector.broadcast %cst_101 : f32 to vector<2x128xf32>
    %262 = arith.addf %260, %261 : vector<2x128xf32>
    %cst_102 = arith.constant 5.000000e-01 : f32
    %263 = vector.broadcast %cst_102 : f32 to vector<2x128xf32>
    %264 = arith.mulf %263, %262 : vector<2x128xf32>
    %265 = vector.extract_strided_slice %240 {offsets = [0, 384], sizes = [2, 128], strides = [1, 1]} : vector<2x512xf32> to vector<2x128xf32>
    %cst_103 = arith.constant 5.000000e-01 : f32
    %266 = vector.broadcast %cst_103 : f32 to vector<2x128xf32>
    %267 = arith.mulf %266, %265 : vector<2x128xf32>
    %268 = math.tanh %267 : vector<2x128xf32>
    %cst_104 = arith.constant 1.000000e+00 : f32
    %269 = vector.broadcast %cst_104 : f32 to vector<2x128xf32>
    %270 = arith.addf %268, %269 : vector<2x128xf32>
    %cst_105 = arith.constant 5.000000e-01 : f32
    %271 = vector.broadcast %cst_105 : f32 to vector<2x128xf32>
    %272 = arith.mulf %271, %270 : vector<2x128xf32>
    %273 = arith.mulf %231, %256 : vector<2x128xf32>
    %274 = arith.mulf %248, %264 : vector<2x128xf32>
    %275 = arith.addf %273, %274 : vector<2x128xf32>
    %276 = math.tanh %275 : vector<2x128xf32>
    %277 = arith.mulf %272, %276 : vector<2x128xf32>
    %278 = arith.index_cast %c5_i32 : i32 to index
    %c0_106 = arith.constant 0 : index
    %c0_107 = arith.constant 0 : index
    %279 = vector.load %arg6[%278, %c0_106, %c0_107] : memref<8x2x128xf32, #tpu.memory_space<vmem>>, vector<1x2x128xf32>
    %280 = vector.shape_cast %279 : vector<1x2x128xf32> to vector<2x128xf32>
    %281 = vector.shape_cast %275 : vector<2x128xf32> to vector<1x2x128xf32>
    tpu.vector_store %arg6[%278, %c0_106, %c0_107], %281 {strides = array<i32>} : memref<8x2x128xf32, #tpu.memory_space<vmem>>, vector<1x2x128xf32>,
    %c6_i32 = arith.constant 6 : i32
    %282 = arith.index_cast %c6_i32 : i32 to index
    %c0_108 = arith.constant 0 : index
    %c0_109 = arith.constant 0 : index
    %283 = vector.load %arg2[%282, %c0_108, %c0_109] : memref<8x2x512xf32, #tpu.memory_space<vmem>>, vector<1x2x512xf32>
    %284 = vector.shape_cast %283 : vector<1x2x512xf32> to vector<2x512xf32>
    %cst_110 = arith.constant dense<0.000000e+00> : vector<2x512xf32>
    %285 = tpu.matmul %275, %3, %cst_110 {dimension_numbers = #tpu.dot_dimension_numbers<[1], [0], [0], [1], [0, 0, 1, 1], [], []>} : vector<2x128xf32>, vector<128x512xf32>, vector<2x512xf32> -> vector<2x512xf32>
    %286 = arith.addf %284, %285 : vector<2x512xf32>
    %287 = vector.extract_strided_slice %286 {offsets = [0, 0], sizes = [2, 128], strides = [1, 1]} : vector<2x512xf32> to vector<2x128xf32>
    %cst_111 = arith.constant 5.000000e-01 : f32
    %288 = vector.broadcast %cst_111 : f32 to vector<2x128xf32>
    %289 = arith.mulf %288, %287 : vector<2x128xf32>
    %290 = math.tanh %289 : vector<2x128xf32>
    %cst_112 = arith.constant 1.000000e+00 : f32
    %291 = vector.broadcast %cst_112 : f32 to vector<2x128xf32>
    %292 = arith.addf %290, %291 : vector<2x128xf32>
    %cst_113 = arith.constant 5.000000e-01 : f32
    %293 = vector.broadcast %cst_113 : f32 to vector<2x128xf32>
    %294 = arith.mulf %293, %292 : vector<2x128xf32>
    %295 = vector.extract_strided_slice %286 {offsets = [0, 128], sizes = [2, 128], strides = [1, 1]} : vector<2x512xf32> to vector<2x128xf32>
    %cst_114 = arith.constant 5.000000e-01 : f32
    %296 = vector.broadcast %cst_114 : f32 to vector<2x128xf32>
    %297 = arith.mulf %296, %295 : vector<2x128xf32>
    %298 = math.tanh %297 : vector<2x128xf32>
    %cst_115 = arith.constant 1.000000e+00 : f32
    %299 = vector.broadcast %cst_115 : f32 to vector<2x128xf32>
    %300 = arith.addf %298, %299 : vector<2x128xf32>
    %cst_116 = arith.constant 5.000000e-01 : f32
    %301 = vector.broadcast %cst_116 : f32 to vector<2x128xf32>
    %302 = arith.mulf %301, %300 : vector<2x128xf32>
    %303 = vector.extract_strided_slice %286 {offsets = [0, 256], sizes = [2, 128], strides = [1, 1]} : vector<2x512xf32> to vector<2x128xf32>
    %cst_117 = arith.constant 5.000000e-01 : f32
    %304 = vector.broadcast %cst_117 : f32 to vector<2x128xf32>
    %305 = arith.mulf %304, %303 : vector<2x128xf32>
    %306 = math.tanh %305 : vector<2x128xf32>
    %cst_118 = arith.constant 1.000000e+00 : f32
    %307 = vector.broadcast %cst_118 : f32 to vector<2x128xf32>
    %308 = arith.addf %306, %307 : vector<2x128xf32>
    %cst_119 = arith.constant 5.000000e-01 : f32
    %309 = vector.broadcast %cst_119 : f32 to vector<2x128xf32>
    %310 = arith.mulf %309, %308 : vector<2x128xf32>
    %311 = vector.extract_strided_slice %286 {offsets = [0, 384], sizes = [2, 128], strides = [1, 1]} : vector<2x512xf32> to vector<2x128xf32>
    %cst_120 = arith.constant 5.000000e-01 : f32
    %312 = vector.broadcast %cst_120 : f32 to vector<2x128xf32>
    %313 = arith.mulf %312, %311 : vector<2x128xf32>
    %314 = math.tanh %313 : vector<2x128xf32>
    %cst_121 = arith.constant 1.000000e+00 : f32
    %315 = vector.broadcast %cst_121 : f32 to vector<2x128xf32>
    %316 = arith.addf %314, %315 : vector<2x128xf32>
    %cst_122 = arith.constant 5.000000e-01 : f32
    %317 = vector.broadcast %cst_122 : f32 to vector<2x128xf32>
    %318 = arith.mulf %317, %316 : vector<2x128xf32>
    %319 = arith.mulf %277, %302 : vector<2x128xf32>
    %320 = arith.mulf %294, %310 : vector<2x128xf32>
    %321 = arith.addf %319, %320 : vector<2x128xf32>
    %322 = math.tanh %321 : vector<2x128xf32>
    %323 = arith.mulf %318, %322 : vector<2x128xf32>
    %324 = arith.index_cast %c6_i32 : i32 to index
    %c0_123 = arith.constant 0 : index
    %c0_124 = arith.constant 0 : index
    %325 = vector.load %arg6[%324, %c0_123, %c0_124] : memref<8x2x128xf32, #tpu.memory_space<vmem>>, vector<1x2x128xf32>
    %326 = vector.shape_cast %325 : vector<1x2x128xf32> to vector<2x128xf32>
    %327 = vector.shape_cast %321 : vector<2x128xf32> to vector<1x2x128xf32>
    tpu.vector_store %arg6[%324, %c0_123, %c0_124], %327 {strides = array<i32>} : memref<8x2x128xf32, #tpu.memory_space<vmem>>, vector<1x2x128xf32>,
    %c7_i32 = arith.constant 7 : i32
    %328 = arith.index_cast %c7_i32 : i32 to index
    %c0_125 = arith.constant 0 : index
    %c0_126 = arith.constant 0 : index
    %329 = vector.load %arg2[%328, %c0_125, %c0_126] : memref<8x2x512xf32, #tpu.memory_space<vmem>>, vector<1x2x512xf32>
    %330 = vector.shape_cast %329 : vector<1x2x512xf32> to vector<2x512xf32>
    %cst_127 = arith.constant dense<0.000000e+00> : vector<2x512xf32>
    %331 = tpu.matmul %321, %3, %cst_127 {dimension_numbers = #tpu.dot_dimension_numbers<[1], [0], [0], [1], [0, 0, 1, 1], [], []>} : vector<2x128xf32>, vector<128x512xf32>, vector<2x512xf32> -> vector<2x512xf32>
    %332 = arith.addf %330, %331 : vector<2x512xf32>
    %333 = vector.extract_strided_slice %332 {offsets = [0, 0], sizes = [2, 128], strides = [1, 1]} : vector<2x512xf32> to vector<2x128xf32>
    %cst_128 = arith.constant 5.000000e-01 : f32
    %334 = vector.broadcast %cst_128 : f32 to vector<2x128xf32>
    %335 = arith.mulf %334, %333 : vector<2x128xf32>
    %336 = math.tanh %335 : vector<2x128xf32>
    %cst_129 = arith.constant 1.000000e+00 : f32
    %337 = vector.broadcast %cst_129 : f32 to vector<2x128xf32>
    %338 = arith.addf %336, %337 : vector<2x128xf32>
    %cst_130 = arith.constant 5.000000e-01 : f32
    %339 = vector.broadcast %cst_130 : f32 to vector<2x128xf32>
    %340 = arith.mulf %339, %338 : vector<2x128xf32>
    %341 = vector.extract_strided_slice %332 {offsets = [0, 128], sizes = [2, 128], strides = [1, 1]} : vector<2x512xf32> to vector<2x128xf32>
    %cst_131 = arith.constant 5.000000e-01 : f32
    %342 = vector.broadcast %cst_131 : f32 to vector<2x128xf32>
    %343 = arith.mulf %342, %341 : vector<2x128xf32>
    %344 = math.tanh %343 : vector<2x128xf32>
    %cst_132 = arith.constant 1.000000e+00 : f32
    %345 = vector.broadcast %cst_132 : f32 to vector<2x128xf32>
    %346 = arith.addf %344, %345 : vector<2x128xf32>
    %cst_133 = arith.constant 5.000000e-01 : f32
    %347 = vector.broadcast %cst_133 : f32 to vector<2x128xf32>
    %348 = arith.mulf %347, %346 : vector<2x128xf32>
    %349 = vector.extract_strided_slice %332 {offsets = [0, 256], sizes = [2, 128], strides = [1, 1]} : vector<2x512xf32> to vector<2x128xf32>
    %cst_134 = arith.constant 5.000000e-01 : f32
    %350 = vector.broadcast %cst_134 : f32 to vector<2x128xf32>
    %351 = arith.mulf %350, %349 : vector<2x128xf32>
    %352 = math.tanh %351 : vector<2x128xf32>
    %cst_135 = arith.constant 1.000000e+00 : f32
    %353 = vector.broadcast %cst_135 : f32 to vector<2x128xf32>
    %354 = arith.addf %352, %353 : vector<2x128xf32>
    %cst_136 = arith.constant 5.000000e-01 : f32
    %355 = vector.broadcast %cst_136 : f32 to vector<2x128xf32>
    %356 = arith.mulf %355, %354 : vector<2x128xf32>
    %357 = vector.extract_strided_slice %332 {offsets = [0, 384], sizes = [2, 128], strides = [1, 1]} : vector<2x512xf32> to vector<2x128xf32>
    %cst_137 = arith.constant 5.000000e-01 : f32
    %358 = vector.broadcast %cst_137 : f32 to vector<2x128xf32>
    %359 = arith.mulf %358, %357 : vector<2x128xf32>
    %360 = math.tanh %359 : vector<2x128xf32>
    %cst_138 = arith.constant 1.000000e+00 : f32
    %361 = vector.broadcast %cst_138 : f32 to vector<2x128xf32>
    %362 = arith.addf %360, %361 : vector<2x128xf32>
    %cst_139 = arith.constant 5.000000e-01 : f32
    %363 = vector.broadcast %cst_139 : f32 to vector<2x128xf32>
    %364 = arith.mulf %363, %362 : vector<2x128xf32>
    %365 = arith.mulf %323, %348 : vector<2x128xf32>
    %366 = arith.mulf %340, %356 : vector<2x128xf32>
    %367 = arith.addf %365, %366 : vector<2x128xf32>
    %368 = math.tanh %367 : vector<2x128xf32>
    %369 = arith.mulf %364, %368 : vector<2x128xf32>
    %370 = arith.index_cast %c7_i32 : i32 to index
    %c0_140 = arith.constant 0 : index
    %c0_141 = arith.constant 0 : index
    %371 = vector.load %arg6[%370, %c0_140, %c0_141] : memref<8x2x128xf32, #tpu.memory_space<vmem>>, vector<1x2x128xf32>
    %372 = vector.shape_cast %371 : vector<1x2x128xf32> to vector<2x128xf32>
    %373 = vector.shape_cast %367 : vector<2x128xf32> to vector<1x2x128xf32>
    tpu.vector_store %arg6[%370, %c0_140, %c0_141], %373 {strides = array<i32>} : memref<8x2x128xf32, #tpu.memory_space<vmem>>, vector<1x2x128xf32>,
    %c8_i32 = arith.constant 8 : i32
    %c0_142 = arith.constant 0 : index
    %c0_143 = arith.constant 0 : index
    %374 = vector.load %arg7[%c0_142, %c0_143] : memref<2x128xf32, #tpu.memory_space<vmem>>, vector<2x128xf32>
    tpu.vector_store %arg7[%c0_142, %c0_143], %367 {strides = array<i32>} : memref<2x128xf32, #tpu.memory_space<vmem>>, vector<2x128xf32>,
    %c0_144 = arith.constant 0 : index
    %c0_145 = arith.constant 0 : index
    %375 = vector.load %arg8[%c0_144, %c0_145] : memref<2x128xf32, #tpu.memory_space<vmem>>, vector<2x128xf32>
    tpu.vector_store %arg8[%c0_144, %c0_145], %369 {strides = array<i32>} : memref<2x128xf32, #tpu.memory_space<vmem>>, vector<2x128xf32>,
    return
  }
  func.func @transform_0(%arg0: i32, %arg1: i32) -> (i32, i32, i32) {
    %c0_i32 = arith.constant 0 : i32
    %c0_i32_0 = arith.constant 0 : i32
    return %arg1, %arg0, %c0_i32 : i32, i32, i32
  }
  func.func @transform_1(%arg0: i32, %arg1: i32) -> (i32, i32) {
    %c0_i32 = arith.constant 0 : i32
    %c0_i32_0 = arith.constant 0 : i32
    return %arg0, %c0_i32 : i32, i32
  }
  func.func @transform_2(%arg0: i32, %arg1: i32) -> (i32, i32) {
    %c0_i32 = arith.constant 0 : i32
    %c0_i32_0 = arith.constant 0 : i32
    return %arg0, %c0_i32 : i32, i32
  }
  func.func @transform_3(%arg0: i32, %arg1: i32) -> (i32, i32) {
    %c0_i32 = arith.constant 0 : i32
    %c0_i32_0 = arith.constant 0 : i32
    %c0_i32_1 = arith.constant 0 : i32
    return %c0_i32, %c0_i32_0 : i32, i32
  }
  func.func @transform_4(%arg0: i32, %arg1: i32) -> (i32, i32, i32) {
    %c0_i32 = arith.constant 0 : i32
    %c0_i32_0 = arith.constant 0 : i32
    return %arg1, %arg0, %c0_i32 : i32, i32, i32
  }
}

</mosaic_0001>

<llo_original>
// kernel: tpu_custom_call.1
$region0: #{tpu_custom_call.1}
  #allocation0 [shape = 'u32[]', space=smem, size = 0x4, offset = 0x4, fixed_abs, tag = 'smem constant byte address 0x4 - core index']
  #allocation1 [shape = 'u32[144,128]{1,0:T(1,128)}', space=vmem, size = 0x12000, scoped, tag = 'internal scratch']
  #allocation2 [shape = 'f32[2,128]{1,0:T(2,128)}', space=vmem, size = 0x400, scoped, tag = 'scratch operand']
  #allocation3 [shape = 'f32[2,128]{1,0:T(2,128)}', space=vmem, size = 0x400, scoped, tag = 'scratch operand']
  %s0 = inlined_call_operand.hbm [shape: f32[16,2,512], index: 0, kind: input, shape index: {}]
  %s1 = inlined_call_operand.vmem [shape: f32[2,128], index: 1, kind: input, shape index: {}]
  %s2 = inlined_call_operand.vmem [shape: f32[2,128], index: 2, kind: input, shape index: {}]
  %s3 = inlined_call_operand.hbm [shape: f32[128,512], index: 3, kind: input, shape index: {}]
  %s4 = inlined_call_operand.hbm [shape: f32[16,2,128], index: 4, kind: output, shape index: {}]
  %s5 = sld [smem:[#allocation0]]
  $region61: #{tpu_custom_call.1} parent=0
    _
  %s7 = ssub.s32 1, %s5
  %s8 = scalar_select 0, %s7, %s5
  $region1: #{tpu_custom_call.1} parent=0
    #allocation4 [shape = 'u8[65536]{0}', space=vmem, size = 0x10000, scoped, tag = 'input window, operand 0']
    #allocation5 [shape = 's32[2]{0}', space=sflag, size = 0x8, scoped, tag = 'scoped memory for tpu_custom_call.1']
    #allocation6 [shape = 's32[2]{0}', space=sflag, size = 0x8, scoped, tag = 'scoped memory for tpu_custom_call.1']
    #allocation7 [shape = 'u8[262144]{0}', space=vmem, size = 0x40000, scoped, tag = 'input window, operand 3, single buffered']
    #allocation8 [shape = 's32[1]{0}', space=sflag, size = 0x4, scoped, tag = 'scoped memory for tpu_custom_call.1']
    #allocation9 [shape = 'u8[16384]{0}', space=vmem, size = 0x4000, scoped, tag = 'output window, operand 0']
    %9 = vsyncpa [#allocation5], 0
    %s10 = scalar_lea.sflag [#allocation5], 1
    %11 = vsyncpa %s10, 0
    %12 = vsyncpa [#allocation8], 0
    %13 = vsyncpa [#allocation6], 0
    %s14 = scalar_lea.sflag [#allocation6], 1
    %15 = vsyncpa %s14, 0
    loop: start=0, step=1, limit=4
    $region2: #{tpu_custom_call.1} parent=1 // loop_pre_header
      _
    $region3: #{tpu_custom_call.1} parent=1 // loop_header
      %s17 = sphi 0, %s21
      %p18 = scmp.ge.s32.totalorder %s17, 4
      %s24 = sphi 0, %s36
      %s25 = sphi 0, %s32
      %s26 = sphi 0, %s24
      %s27 = sphi 0, %s25
      %s28 = sphi 0, %s26
      %s29 = sphi 0, %s27
      %s41 = sphi 0, %s43
      %s44 = sphi 0, %s41
      %s45 = sphi 0, %s44
      %s61 = sphi 0, %s45
      %s67 = sphi 0, %s69
      %s70 = sphi 0, %s67
      %s71 = sphi 0, %s70
      %s87 = sphi 0, %s71
      %s93 = sphi 0, %s95
      %s96 = sphi 0, %s93
      %s97 = sphi 0, %s96
      %s113 = sphi 0, %s97
      %s117 = sphi 0, %s117
      %s119 = sphi 0, %s117
      %s120 = sphi 0, %s119
      %s134 = sphi 0, %s120
      %s142 = sphi 0, %s144
      %s145 = sphi 0, %s142
      %s146 = sphi 0, %s145
      %s162 = sphi 0, %s146
    $region4: #{tpu_custom_call.1} parent=1 // loop_header_branch
      %20 = sbr.rel (%p18) target = $region8
    $region5: #{tpu_custom_call.1} parent=1 // loop_body
      %s22 = ssub.s32 %s17, 1
      %s23 = ssub.s32 %s17, 2
      %s30 = sadd.s32 1, %s25
      %p31 = scmp.ge.s32.totalorder %s30, 2
      %s32 = scalar_select %p31, 0, %s30
      %s33 = sadd.s32 1, %s24
      %s34 = scalar_select %p31, %s33, %s24
      %p35 = scmp.ge.s32.totalorder %s34, 1
      %s36 = scalar_select %p35, 0, %s34
      %s37 = ssub.s32 %s25, %s32
      %s38 = ssub.s32 %s24, %s36
      %s39 = sor.u32 %s37, %s38
      %p40 = scmp.eq.s32.totalorder %s39, 0
      %s42 = sadd.s32 %s41, 1
      %s43 = scalar_select %p40, %s41, %s42
      %p46 = pneg %p40
      %p47 = scmp.eq.s32.totalorder %s17, 1
      %p48 = por %p46, %p47
      %p49 = scmp.ne.s32.totalorder %s41, %s44
      %p50 = scmp.eq.s32.totalorder %s17, 0
      %p51 = por %p49, %p50
      %p52 = scmp.ne.s32.totalorder %s41, %s44
      %p53 = scmp.eq.s32.totalorder %s22, 1
      %p54 = por %p52, %p53
      %p55 = scmp.ne.s32.totalorder %s44, %s45
      %p56 = scmp.eq.s32.totalorder %s22, 0
      %p57 = por %p55, %p56
      %p58 = scmp.ne.s32.totalorder %s44, %s45
      %p59 = scmp.eq.s32.totalorder %s23, 1
      %p60 = por %p58, %p59
      %p62 = scmp.ne.s32.totalorder %s45, %s61
      %p63 = scmp.eq.s32.totalorder %s23, 0
      %p64 = por %p62, %p63
      %s65 = ssub.s32 %s24, %s36
      %p66 = scmp.eq.s32.totalorder %s65, 0
      %s68 = sadd.s32 %s67, 1
      %s69 = scalar_select %p66, %s67, %s68
      %p72 = pneg %p66
      %p73 = scmp.eq.s32.totalorder %s17, 1
      %p74 = por %p72, %p73
      %p75 = scmp.ne.s32.totalorder %s67, %s70
      %p76 = scmp.eq.s32.totalorder %s17, 0
      %p77 = por %p75, %p76
      %p78 = scmp.ne.s32.totalorder %s67, %s70
      %p79 = scmp.eq.s32.totalorder %s22, 1
      %p80 = por %p78, %p79
      %p81 = scmp.ne.s32.totalorder %s70, %s71
      %p82 = scmp.eq.s32.totalorder %s22, 0
      %p83 = por %p81, %p82
      %p84 = scmp.ne.s32.totalorder %s70, %s71
      %p85 = scmp.eq.s32.totalorder %s23, 1
      %p86 = por %p84, %p85
      %p88 = scmp.ne.s32.totalorder %s71, %s87
      %p89 = scmp.eq.s32.totalorder %s23, 0
      %p90 = por %p88, %p89
      %s91 = ssub.s32 %s24, %s36
      %p92 = scmp.eq.s32.totalorder %s91, 0
      %s94 = sadd.s32 %s93, 1
      %s95 = scalar_select %p92, %s93, %s94
      %p98 = pneg %p92
      %p99 = scmp.eq.s32.totalorder %s17, 1
      %p100 = por %p98, %p99
      %p101 = scmp.ne.s32.totalorder %s93, %s96
      %p102 = scmp.eq.s32.totalorder %s17, 0
      %p103 = por %p101, %p102
      %p104 = scmp.ne.s32.totalorder %s93, %s96
      %p105 = scmp.eq.s32.totalorder %s22, 1
      %p106 = por %p104, %p105
      %p107 = scmp.ne.s32.totalorder %s96, %s97
      %p108 = scmp.eq.s32.totalorder %s22, 0
      %p109 = por %p107, %p108
      %p110 = scmp.ne.s32.totalorder %s96, %s97
      %p111 = scmp.eq.s32.totalorder %s23, 1
      %p112 = por %p110, %p111
      %p114 = scmp.ne.s32.totalorder %s97, %s113
      %p115 = scmp.eq.s32.totalorder %s23, 0
      %p116 = por %p114, %p115
      %s118 = sadd.s32 %s117, 1
      %p121 = scmp.eq.s32.totalorder %s17, 1
      %p122 = scmp.ne.s32.totalorder %s117, %s119
      %p123 = scmp.eq.s32.totalorder %s17, 0
      %p124 = por %p122, %p123
      %p125 = scmp.ne.s32.totalorder %s117, %s119
      %p126 = scmp.eq.s32.totalorder %s22, 1
      %p127 = por %p125, %p126
      %p128 = scmp.ne.s32.totalorder %s119, %s120
      %p129 = scmp.eq.s32.totalorder %s22, 0
      %p130 = por %p128, %p129
      %p131 = scmp.ne.s32.totalorder %s119, %s120
      %p132 = scmp.eq.s32.totalorder %s23, 1
      %p133 = por %p131, %p132
      %p135 = scmp.ne.s32.totalorder %s120, %s134
      %p136 = scmp.eq.s32.totalorder %s23, 0
      %p137 = por %p135, %p136
      %s138 = ssub.s32 %s25, %s32
      %s139 = ssub.s32 %s24, %s36
      %s140 = sor.u32 %s138, %s139
      %p141 = scmp.eq.s32.totalorder %s140, 0
      %s143 = sadd.s32 %s142, 1
      %s144 = scalar_select %p141, %s142, %s143
      %p147 = pneg %p141
      %p148 = scmp.eq.s32.totalorder %s17, 1
      %p149 = por %p147, %p148
      %p150 = scmp.ne.s32.totalorder %s142, %s145
      %p151 = scmp.eq.s32.totalorder %s17, 0
      %p152 = por %p150, %p151
      %p153 = scmp.ne.s32.totalorder %s142, %s145
      %p154 = scmp.eq.s32.totalorder %s22, 1
      %p155 = por %p153, %p154
      %p156 = scmp.ne.s32.totalorder %s145, %s146
      %p157 = scmp.eq.s32.totalorder %s22, 0
      %p158 = por %p156, %p157
      %p159 = scmp.ne.s32.totalorder %s145, %s146
      %p160 = scmp.eq.s32.totalorder %s23, 1
      %p161 = por %p159, %p160
      %p163 = scmp.ne.s32.totalorder %s146, %s162
      %p164 = scmp.eq.s32.totalorder %s23, 0
      %p165 = por %p163, %p164
      %p166 = scmp.le.s32.totalorder 1, %s17
      %p167 = scmp.lt.s32.totalorder %s17, 3
      %p168 = pnand %p166, %p167
      %p169 = pneg %p168
      // Predicated region
      $region9: #{tpu_custom_call.1} parent=5 // pred_check
        _
      $region10: #{tpu_custom_call.1} parent=5 // pred_check_branch
        %171 = sbr.rel (%p168) target = $region12
      $region11: #{tpu_custom_call.1} parent=5 // pred_region
        %s172 = ssub.s32 %s17, 1
        // Predicated region
        $region13: #{tpu_custom_call.1} parent=11 // pred_check
          %p173 = pneg %p83
        $region14: #{tpu_custom_call.1} parent=11 // pred_check_branch
          %175 = sbr.rel (%p173) target = $region16
        $region15: #{tpu_custom_call.1} parent=11 // pred_region
          %p176 = scmp.lt.s32.totalorder %s26, 0
          %s177 = scalar_select %p176, %s26, 0
          %s178 = smul.addr %s177, 2
          %s179 = scalar_lea.vmem %s1, %s178
        $region16: #{tpu_custom_call.1} parent=11 // pred_fallthru
          _
        // Predicated region
        $region17: #{tpu_custom_call.1} parent=11 // pred_check
          %p180 = pneg %p109
        $region18: #{tpu_custom_call.1} parent=11 // pred_check_branch
          %182 = sbr.rel (%p180) target = $region20
        $region19: #{tpu_custom_call.1} parent=11 // pred_region
          %p183 = scmp.lt.s32.totalorder %s26, 0
          %s184 = scalar_select %p183, %s26, 0
          %s185 = smul.addr %s184, 2
          %s186 = scalar_lea.vmem %s2, %s185
        $region20: #{tpu_custom_call.1} parent=11 // pred_fallthru
          _
        // Predicated region
        $region21: #{tpu_custom_call.1} parent=11 // pred_check
          %p187 = pneg %p130
        $region22: #{tpu_custom_call.1} parent=11 // pred_check_branch
          %189 = sbr.rel (%p187) target = $region24
        $region23: #{tpu_custom_call.1} parent=11 // pred_region
          %s191 = ssub.s32 8192, 8192
          %192 = vsyncadd [#allocation8], %s191
          %s193 = sshll.u32 [#allocation7], 4
          %s194 = int_to_ptr.vmem [resolvable:$true] %s193
          %199 = dma.hbm_to_vmem [thread:$0]  %s3, 8192, %s194, [#allocation8], 512, 512, 32
        $region24: #{tpu_custom_call.1} parent=11 // pred_fallthru
          _
      $region12: #{tpu_custom_call.1} parent=5 // pred_fallthru
        _
      %p200 = scmp.lt.s32.totalorder %s17, 2
      // Predicated region
      $region25: #{tpu_custom_call.1} parent=5 // pred_check
        %p201 = pneg %p200
      $region26: #{tpu_custom_call.1} parent=5 // pred_check_branch
        %203 = sbr.rel (%p201) target = $region28
      $region27: #{tpu_custom_call.1} parent=5 // pred_region
        // Predicated region
        $region29: #{tpu_custom_call.1} parent=27 // pred_check
          %p204 = pneg %p51
        $region30: #{tpu_custom_call.1} parent=27 // pred_check_branch
          %206 = sbr.rel (%p204) target = $region32
        $region31: #{tpu_custom_call.1} parent=27 // pred_region
          %s207 = sand.u32 %s41, 1
          %s208 = scalar_lea.sflag [#allocation5], %s207
          %s209 = sand.u32 %s41, 1
          %s210 = smul.addr %s209, 64
          %s211 = scalar_lea.vmem [#allocation4], %s210
          %s212 = smul.u32 8, %s25
          %s214 = ssub.s32 1024, 1024
          %215 = vsyncadd %s208, %s214
          %s216 = smul.addr %s24, 4
          %s217 = smul.addr %s212, 4
          %s218 = sadd.s32 %s216, %s217
          %s219 = smul.addr %s218, 32
          %s220 = scalar_lea.hbm %s0, %s219
          %s221 = sshll.u32 %s211, 4
          %s222 = int_to_ptr.vmem [resolvable:$true] %s221
          %227 = dma.hbm_to_vmem [thread:$0]  %s220, 1024, %s222, %s208, 128, 128, 8
        $region32: #{tpu_custom_call.1} parent=27 // pred_fallthru
          _
      $region28: #{tpu_custom_call.1} parent=5 // pred_fallthru
        _
      %p228 = scmp.le.s32.totalorder 1, %s17
      %p229 = scmp.lt.s32.totalorder %s17, 3
      %p230 = pnand %p228, %p229
      %p231 = pneg %p230
      // Predicated region
      $region33: #{tpu_custom_call.1} parent=5 // pred_check
        _
      $region34: #{tpu_custom_call.1} parent=5 // pred_check_branch
        %233 = sbr.rel (%p230) target = $region36
      $region35: #{tpu_custom_call.1} parent=5 // pred_region
        %s234 = ssub.s32 %s17, 1
        %s235 = sand.u32 %s44, 1
        %s236 = scalar_lea.sflag [#allocation5], %s235
        %s237 = sand.u32 %s44, 1
        %s238 = smul.addr %s237, 64
        %s239 = scalar_lea.vmem [#allocation4], %s238
        // Predicated region
        $region37: #{tpu_custom_call.1} parent=35 // pred_check
          %p240 = pneg %p57
        $region38: #{tpu_custom_call.1} parent=35 // pred_check_branch
          %242 = sbr.rel (%p240) target = $region40
        $region39: #{tpu_custom_call.1} parent=35 // pred_region
          %243 = dma.done %s236, 1024
        $region40: #{tpu_custom_call.1} parent=35 // pred_fallthru
          _
        // Predicated region
        $region41: #{tpu_custom_call.1} parent=35 // pred_check
          %p244 = pneg %p130
        $region42: #{tpu_custom_call.1} parent=35 // pred_check_branch
          %246 = sbr.rel (%p244) target = $region44
        $region43: #{tpu_custom_call.1} parent=35 // pred_region
          %247 = dma.done [#allocation8], 8192
        $region44: #{tpu_custom_call.1} parent=35 // pred_fallthru
          _
        %s248 = sand.u32 %s44, 1
        %s249 = scalar_lea.sflag [#allocation5], %s248
        %s250 = sand.u32 %s44, 1
        %s251 = smul.addr %s250, 64
        %s252 = scalar_lea.vmem [#allocation4], %s251
        %p253 = pneg %p57
        %p254 = pneg %p54
        %p255 = scmp.lt.s32.totalorder %s26, 0
        %s256 = scalar_select %p255, %s26, 0
        %s257 = smul.addr %s256, 2
        %s258 = scalar_lea.vmem %s1, %s257
        %p259 = pneg %p83
        %p260 = pneg %p80
        %p261 = scmp.lt.s32.totalorder %s26, 0
        %s262 = scalar_select %p261, %s26, 0
        %s263 = smul.addr %s262, 2
        %s264 = scalar_lea.vmem %s2, %s263
        %p265 = pneg %p109
        %p266 = pneg %p106
        %p267 = pneg %p130
        %p268 = pneg %p127
        %p269 = pneg %p158
        %p270 = pneg %p155
        %s271 = sand.u32 %s145, 1
        %s272 = scalar_lea.sflag [#allocation6], %s271
        %s273 = sand.u32 %s145, 1
        %s274 = smul.addr %s273, 16
        %s275 = scalar_lea.vmem [#allocation9], %s274
        %s276 = smul.u32 8, %s27
        %p277 = scmp.lt.s32.totalorder %s26, 0
        %s278 = scalar_select %p277, %s26, 0
        %s279 = smul.addr %s278, 2
        %s280 = scalar_lea.vmem %s1, %s279
        %p281 = scmp.lt.s32.totalorder %s26, 0
        %s282 = scalar_select %p281, %s26, 0
        %s283 = smul.addr %s282, 2
        %s284 = scalar_lea.vmem %s2, %s283
        %s285 = smul.u32 8, %s27
        %p286 = scmp.eq.s32.totalorder %s27, 0
        // Predicated region
        $region45: #{tpu_custom_call.1} parent=35 // pred_check
          %p287 = pneg %p286
        $region46: #{tpu_custom_call.1} parent=35 // pred_check_branch
          %289 = sbr.rel (%p287) target = $region48
        $region47: #{tpu_custom_call.1} parent=35 // pred_region
          %v290 = vld [vmem:[%s280] sm:$0x3]
          %291 = vst [vmem:[#allocation2] sm:$0x3] %v290
          %v292 = vld [vmem:[%s284] sm:$0x3]
          %293 = vst [vmem:[#allocation3] sm:$0x3] %v292
        $region48: #{tpu_custom_call.1} parent=35 // pred_fallthru
          _
        %v294 = vld [vmem:[#allocation7] sm:$0xff]
        %v295 = vld [vmem:[#allocation7 + $0x8] sm:$0xff]
        %v296 = vld [vmem:[#allocation7 + $0x10] sm:$0xff]
        %v297 = vld [vmem:[#allocation7 + $0x18] sm:$0xff]
        %v298 = vld [vmem:[#allocation7 + $0x20] sm:$0xff]
        %v299 = vld [vmem:[#allocation7 + $0x28] sm:$0xff]
        %v300 = vld [vmem:[#allocation7 + $0x30] sm:$0xff]
        %v301 = vld [vmem:[#allocation7 + $0x38] sm:$0xff]
        %v302 = vld [vmem:[#allocation7 + $0x40] sm:$0xff]
        %v303 = vld [vmem:[#allocation7 + $0x48] sm:$0xff]
        %v304 = vld [vmem:[#allocation7 + $0x50] sm:$0xff]
        %v305 = vld [vmem:[#allocation7 + $0x58] sm:$0xff]
        %v306 = vld [vmem:[#allocation7 + $0x60] sm:$0xff]
        %v307 = vld [vmem:[#allocation7 + $0x68] sm:$0xff]
        %v308 = vld [vmem:[#allocation7 + $0x70] sm:$0xff]
        %v309 = vld [vmem:[#allocation7 + $0x78] sm:$0xff]
        %v310 = vld [vmem:[#allocation7 + $0x80] sm:$0xff]
        %v311 = vld [vmem:[#allocation7 + $0x88] sm:$0xff]
        %v312 = vld [vmem:[#allocation7 + $0x90] sm:$0xff]
        %v313 = vld [vmem:[#allocation7 + $0x98] sm:$0xff]
        %v314 = vld [vmem:[#allocation7 + $0xa0] sm:$0xff]
        %v315 = vld [vmem:[#allocation7 + $0xa8] sm:$0xff]
        %v316 = vld [vmem:[#allocation7 + $0xb0] sm:$0xff]
        %v317 = vld [vmem:[#allocation7 + $0xb8] sm:$0xff]
        %v318 = vld [vmem:[#allocation7 + $0xc0] sm:$0xff]
        %v319 = vld [vmem:[#allocation7 + $0xc8] sm:$0xff]
        %v320 = vld [vmem:[#allocation7 + $0xd0] sm:$0xff]
        %v321 = vld [vmem:[#allocation7 + $0xd8] sm:$0xff]
        %v322 = vld [vmem:[#allocation7 + $0xe0] sm:$0xff]
        %v323 = vld [vmem:[#allocation7 + $0xe8] sm:$0xff]
        %v324 = vld [vmem:[#allocation7 + $0xf0] sm:$0xff]
        %v325 = vld [vmem:[#allocation7 + $0xf8] sm:$0xff]
        %v326 = vld [vmem:[#allocation7 + $0x100] sm:$0xff]
        %v327 = vld [vmem:[#allocation7 + $0x108] sm:$0xff]
        %v328 = vld [vmem:[#allocation7 + $0x110] sm:$0xff]
        %v329 = vld [vmem:[#allocation7 + $0x118] sm:$0xff]
        %v330 = vld [vmem:[#allocation7 + $0x120] sm:$0xff]
        %v331 = vld [vmem:[#allocation7 + $0x128] sm:$0xff]
        %v332 = vld [vmem:[#allocation7 + $0x130] sm:$0xff]
        %v333 = vld [vmem:[#allocation7 + $0x138] sm:$0xff]
        %v334 = vld [vmem:[#allocation7 + $0x140] sm:$0xff]
        %v335 = vld [vmem:[#allocation7 + $0x148] sm:$0xff]
        %v336 = vld [vmem:[#allocation7 + $0x150] sm:$0xff]
        %v337 = vld [vmem:[#allocation7 + $0x158] sm:$0xff]
        %v338 = vld [vmem:[#allocation7 + $0x160] sm:$0xff]
        %v339 = vld [vmem:[#allocation7 + $0x168] sm:$0xff]
        %v340 = vld [vmem:[#allocation7 + $0x170] sm:$0xff]
        %v341 = vld [vmem:[#allocation7 + $0x178] sm:$0xff]
        %v342 = vld [vmem:[#allocation7 + $0x180] sm:$0xff]
        %v343 = vld [vmem:[#allocation7 + $0x188] sm:$0xff]
        %v344 = vld [vmem:[#allocation7 + $0x190] sm:$0xff]
        %v345 = vld [vmem:[#allocation7 + $0x198] sm:$0xff]
        %v346 = vld [vmem:[#allocation7 + $0x1a0] sm:$0xff]
        %v347 = vld [vmem:[#allocation7 + $0x1a8] sm:$0xff]
        %v348 = vld [vmem:[#allocation7 + $0x1b0] sm:$0xff]
        %v349 = vld [vmem:[#allocation7 + $0x1b8] sm:$0xff]
        %v350 = vld [vmem:[#allocation7 + $0x1c0] sm:$0xff]
        %v351 = vld [vmem:[#allocation7 + $0x1c8] sm:$0xff]
        %v352 = vld [vmem:[#allocation7 + $0x1d0] sm:$0xff]
        %v353 = vld [vmem:[#allocation7 + $0x1d8] sm:$0xff]
        %v354 = vld [vmem:[#allocation7 + $0x1e0] sm:$0xff]
        %v355 = vld [vmem:[#allocation7 + $0x1e8] sm:$0xff]
        %v356 = vld [vmem:[#allocation7 + $0x1f0] sm:$0xff]
        %v357 = vld [vmem:[#allocation7 + $0x1f8] sm:$0xff]
        %v358 = vld [vmem:[#allocation2] sm:$0x3]
        %v359 = vld [vmem:[#allocation3] sm:$0x3]
        %v360 = vld [vmem:[%s239] sm:$0xff]
        %361 = vmatprep.subr.mxu0 %v295
        %362 = vmatpush1.msra.mxu0 %v294
        %363 = vmatprep.subr.mxu0 %v299
        %364 = vmatpush1.msra.mxu0 %v298
        %365 = vmatprep.subr.mxu0 %v303
        %366 = vmatpush1.msra.mxu0 %v302
        %367 = vmatprep.subr.mxu0 %v307
        %368 = vmatpush1.msra.mxu0 %v306
        %369 = vmatprep.subr.mxu0 %v311
        %370 = vmatpush1.msra.mxu0 %v310
        %371 = vmatprep.subr.mxu0 %v315
        %372 = vmatpush1.msra.mxu0 %v314
        %373 = vmatprep.subr.mxu0 %v319
        %374 = vmatpush1.msra.mxu0 %v318
        %375 = vmatprep.subr.mxu0 %v323
        %376 = vmatpush1.msra.mxu0 %v322
        %377 = vmatprep.subr.mxu0 %v327
        %378 = vmatpush1.msra.mxu0 %v326
        %379 = vmatprep.subr.mxu0 %v331
        %380 = vmatpush1.msra.mxu0 %v330
        %381 = vmatprep.subr.mxu0 %v335
        %382 = vmatpush1.msra.mxu0 %v334
        %383 = vmatprep.subr.mxu0 %v339
        %384 = vmatpush1.msra.mxu0 %v338
        %385 = vmatprep.subr.mxu0 %v343
        %386 = vmatpush1.msra.mxu0 %v342
        %387 = vmatprep.subr.mxu0 %v347
        %388 = vmatpush1.msra.mxu0 %v346
        %389 = vmatprep.subr.mxu0 %v351
        %390 = vmatpush1.msra.mxu0 %v350
        %391 = vmatprep.subr.mxu0 %v355
        %392 = vmatpush1.msra.mxu0 %v354
        %393 = vmatprep.subr.mxu0 0.0
        %394 = vmatpush1.msra.mxu0 0.0
        %395 = vmatprep.subr.mxu0 0.0
        %396 = vmatpush1.msra.mxu0 0.0
        %397 = vmatprep.subr.mxu0 0.0
        %398 = vmatpush1.msra.mxu0 0.0
        %399 = vmatprep.subr.mxu0 0.0
        %400 = vmatpush1.msra.mxu0 0.0
        %401 = vmatprep.subr.mxu0 0.0
        %402 = vmatpush1.msra.mxu0 0.0
        %403 = vmatprep.subr.mxu0 0.0
        %404 = vmatpush1.msra.mxu0 0.0
        %405 = vmatprep.subr.mxu0 0.0
        %406 = vmatpush1.msra.mxu0 0.0
        %407 = vmatprep.subr.mxu0 0.0
        %408 = vmatpush1.msra.mxu0 0.0
        %409 = vmatprep.subr.mxu0 0.0
        %410 = vmatpush1.msra.mxu0 0.0
        %411 = vmatprep.subr.mxu0 0.0
        %412 = vmatpush1.msra.mxu0 0.0
        %413 = vmatprep.subr.mxu0 0.0
        %414 = vmatpush1.msra.mxu0 0.0
        %415 = vmatprep.subr.mxu0 0.0
        %416 = vmatpush1.msra.mxu0 0.0
        %417 = vmatprep.subr.mxu0 0.0
        %418 = vmatpush1.msra.mxu0 0.0
        %419 = vmatprep.subr.mxu0 0.0
        %420 = vmatpush1.msra.mxu0 0.0
        %421 = vmatprep.subr.mxu0 0.0
        %422 = vmatpush1.msra.mxu0 0.0
        %423 = vmatprep.subr.mxu0 0.0
        %424 = vmatpush1.msra.mxu0 0.0
        %425 = vmatprep.mubr.f32.mxu0 0.0
        %426 = vmatmul.mubr.f32.gmra.mrb[0].mxu0 %v358
        %v427 = vpop.f32.mrb[0].mxu0
        %v428 = vadd.f32 0.0, %v427
        %v429 = vpop.f32.mrb[0].mxu0
        %v430 = vadd.f32 0.0, %v429
        %431 = vdwg.mxu0
        %432 = vmatprep.subr.mxu0 %v297
        %433 = vmatpush1.msra.mxu0 %v296
        %434 = vmatprep.subr.mxu0 %v301
        %435 = vmatpush1.msra.mxu0 %v300
        %436 = vmatprep.subr.mxu0 %v305
        %437 = vmatpush1.msra.mxu0 %v304
        %438 = vmatprep.subr.mxu0 %v309
        %439 = vmatpush1.msra.mxu0 %v308
        %440 = vmatprep.subr.mxu0 %v313
        %441 = vmatpush1.msra.mxu0 %v312
        %442 = vmatprep.subr.mxu0 %v317
        %443 = vmatpush1.msra.mxu0 %v316
        %444 = vmatprep.subr.mxu0 %v321
        %445 = vmatpush1.msra.mxu0 %v320
        %446 = vmatprep.subr.mxu0 %v325
        %447 = vmatpush1.msra.mxu0 %v324
        %448 = vmatprep.subr.mxu0 %v329
        %449 = vmatpush1.msra.mxu0 %v328
        %450 = vmatprep.subr.mxu0 %v333
        %451 = vmatpush1.msra.mxu0 %v332
        %452 = vmatprep.subr.mxu0 %v337
        %453 = vmatpush1.msra.mxu0 %v336
        %454 = vmatprep.subr.mxu0 %v341
        %455 = vmatpush1.msra.mxu0 %v340
        %456 = vmatprep.subr.mxu0 %v345
        %457 = vmatpush1.msra.mxu0 %v344
        %458 = vmatprep.subr.mxu0 %v349
        %459 = vmatpush1.msra.mxu0 %v348
        %460 = vmatprep.subr.mxu0 %v353
        %461 = vmatpush1.msra.mxu0 %v352
        %462 = vmatprep.subr.mxu0 %v357
        %463 = vmatpush1.msra.mxu0 %v356
        %464 = vmatprep.subr.mxu0 0.0
        %465 = vmatpush1.msra.mxu0 0.0
        %466 = vmatprep.subr.mxu0 0.0
        %467 = vmatpush1.msra.mxu0 0.0
        %468 = vmatprep.subr.mxu0 0.0
        %469 = vmatpush1.msra.mxu0 0.0
        %470 = vmatprep.subr.mxu0 0.0
        %471 = vmatpush1.msra.mxu0 0.0
        %472 = vmatprep.subr.mxu0 0.0
        %473 = vmatpush1.msra.mxu0 0.0
        %474 = vmatprep.subr.mxu0 0.0
        %475 = vmatpush1.msra.mxu0 0.0
        %476 = vmatprep.subr.mxu0 0.0
        %477 = vmatpush1.msra.mxu0 0.0
        %478 = vmatprep.subr.mxu0 0.0
        %479 = vmatpush1.msra.mxu0 0.0
        %480 = vmatprep.subr.mxu0 0.0
        %481 = vmatpush1.msra.mxu0 0.0
        %482 = vmatprep.subr.mxu0 0.0
        %483 = vmatpush1.msra.mxu0 0.0
        %484 = vmatprep.subr.mxu0 0.0
        %485 = vmatpush1.msra.mxu0 0.0
        %486 = vmatprep.subr.mxu0 0.0
        %487 = vmatpush1.msra.mxu0 0.0
        %488 = vmatprep.subr.mxu0 0.0
        %489 = vmatpush1.msra.mxu0 0.0
        %490 = vmatprep.subr.mxu0 0.0
        %491 = vmatpush1.msra.mxu0 0.0
        %492 = vmatprep.subr.mxu0 0.0
        %493 = vmatpush1.msra.mxu0 0.0
        %494 = vmatprep.subr.mxu0 0.0
        %495 = vmatpush1.msra.mxu0 0.0
        %496 = vmatprep.mubr.f32.mxu0 0.0
        %497 = vmatmul.mubr.f32.gmra.mrb[0].mxu0 %v358
        %v498 = vpop.f32.mrb[0].mxu0
        %v499 = vadd.f32 0.0, %v498
        %v500 = vpop.f32.mrb[0].mxu0
        %v501 = vadd.f32 0.0, %v500
        %502 = vdwg.mxu0
        %v507 = vcombine.low %v428, %v430
        %v508 = vcombine.low %v499, %v501
        %v510 = vunpack.c.l.s4 1983009808
        %v511 = vunpack.c.0.s8 %v510
        %v512 = vlaneseq
        %v513 = vshrl.u32 %v512, 7
        %v514 = vsub.s32 %v511, %v513
        %v515 = vrot.slane %v507, %v514
        %v517 = vunpack.c.l.s4 1983009808
        %v518 = vunpack.c.0.s8 %v517
        %v519 = vlaneseq
        %v520 = vshrl.u32 %v519, 7
        %v521 = vsub.s32 %v518, %v520
        %v522 = vrot.slane %v508, %v521
        %v523 = vcombine.low %v515, %v522
        %v525 = vadd.f32 %v360, %v523
        %v526 = vmul.f32 %v525, 0.5
        %v527 = vtanh.pop %v526
        %v528 = vadd.f32 %v527, 1.0
        %v529 = vmul.f32 %v528, 0.5
        %v531 = vrot.slane %v525, 2
        %v533 = vmul.f32 %v531, 0.5
        %v534 = vtanh.pop %v533
        %v535 = vadd.f32 %v534, 1.0
        %v536 = vmul.f32 %v535, 0.5
        %v537 = vrot.slane %v525, 4
        %v539 = vmul.f32 %v537, 0.5
        %v540 = vtanh.pop %v539
        %v541 = vadd.f32 %v540, 1.0
        %v542 = vmul.f32 %v541, 0.5
        %v543 = vrot.slane %v525, 6
        %v545 = vmul.f32 %v543, 0.5
        %v546 = vtanh.pop %v545
        %v547 = vadd.f32 %v546, 1.0
        %v548 = vmul.f32 %v547, 0.5
        %v549 = vmul.f32 %v359, %v536
        %v550 = vmul.f32 %v529, %v542
        %v551 = vadd.f32 %v549, %v550
        %v552 = vtanh.pop %v551
        %v553 = vmul.f32 %v548, %v552
        %554 = vst [vmem:[%s275] sm:$0x3] %v551
        %s555 = scalar_lea.vmem %s239, 8 [#allocation4]
        %v556 = vld [vmem:[%s555] sm:$0xff]
        %557 = vmatprep.subr.mxu0 %v295
        %558 = vmatpush1.msra.mxu0 %v294
        %559 = vmatprep.subr.mxu0 %v299
        %560 = vmatpush1.msra.mxu0 %v298
        %561 = vmatprep.subr.mxu0 %v303
        %562 = vmatpush1.msra.mxu0 %v302
        %563 = vmatprep.subr.mxu0 %v307
        %564 = vmatpush1.msra.mxu0 %v306
        %565 = vmatprep.subr.mxu0 %v311
        %566 = vmatpush1.msra.mxu0 %v310
        %567 = vmatprep.subr.mxu0 %v315
        %568 = vmatpush1.msra.mxu0 %v314
        %569 = vmatprep.subr.mxu0 %v319
        %570 = vmatpush1.msra.mxu0 %v318
        %571 = vmatprep.subr.mxu0 %v323
        %572 = vmatpush1.msra.mxu0 %v322
        %573 = vmatprep.subr.mxu0 %v327
        %574 = vmatpush1.msra.mxu0 %v326
        %575 = vmatprep.subr.mxu0 %v331
        %576 = vmatpush1.msra.mxu0 %v330
        %577 = vmatprep.subr.mxu0 %v335
        %578 = vmatpush1.msra.mxu0 %v334
        %579 = vmatprep.subr.mxu0 %v339
        %580 = vmatpush1.msra.mxu0 %v338
        %581 = vmatprep.subr.mxu0 %v343
        %582 = vmatpush1.msra.mxu0 %v342
        %583 = vmatprep.subr.mxu0 %v347
        %584 = vmatpush1.msra.mxu0 %v346
        %585 = vmatprep.subr.mxu0 %v351
        %586 = vmatpush1.msra.mxu0 %v350
        %587 = vmatprep.subr.mxu0 %v355
        %588 = vmatpush1.msra.mxu0 %v354
        %589 = vmatprep.subr.mxu0 0.0
        %590 = vmatpush1.msra.mxu0 0.0
        %591 = vmatprep.subr.mxu0 0.0
        %592 = vmatpush1.msra.mxu0 0.0
        %593 = vmatprep.subr.mxu0 0.0
        %594 = vmatpush1.msra.mxu0 0.0
        %595 = vmatprep.subr.mxu0 0.0
        %596 = vmatpush1.msra.mxu0 0.0
        %597 = vmatprep.subr.mxu0 0.0
        %598 = vmatpush1.msra.mxu0 0.0
        %599 = vmatprep.subr.mxu0 0.0
        %600 = vmatpush1.msra.mxu0 0.0
        %601 = vmatprep.subr.mxu0 0.0
        %602 = vmatpush1.msra.mxu0 0.0
        %603 = vmatprep.subr.mxu0 0.0
        %604 = vmatpush1.msra.mxu0 0.0
        %605 = vmatprep.subr.mxu0 0.0
        %606 = vmatpush1.msra.mxu0 0.0
        %607 = vmatprep.subr.mxu0 0.0
        %608 = vmatpush1.msra.mxu0 0.0
        %609 = vmatprep.subr.mxu0 0.0
        %610 = vmatpush1.msra.mxu0 0.0
        %611 = vmatprep.subr.mxu0 0.0
        %612 = vmatpush1.msra.mxu0 0.0
        %613 = vmatprep.subr.mxu0 0.0
        %614 = vmatpush1.msra.mxu0 0.0
        %615 = vmatprep.subr.mxu0 0.0
        %616 = vmatpush1.msra.mxu0 0.0
        %617 = vmatprep.subr.mxu0 0.0
        %618 = vmatpush1.msra.mxu0 0.0
        %619 = vmatprep.subr.mxu0 0.0
        %620 = vmatpush1.msra.mxu0 0.0
        %621 = vmatprep.mubr.f32.mxu0 0.0
        %622 = vmatmul.mubr.f32.gmra.mrb[0].mxu0 %v551
        %v623 = vpop.f32.mrb[0].mxu0
        %v624 = vadd.f32 0.0, %v623
        %v625 = vpop.f32.mrb[0].mxu0
        %v626 = vadd.f32 0.0, %v625
        %627 = vdwg.mxu0
        %628 = vmatprep.subr.mxu0 %v297
        %629 = vmatpush1.msra.mxu0 %v296
        %630 = vmatprep.subr.mxu0 %v301
        %631 = vmatpush1.msra.mxu0 %v300
        %632 = vmatprep.subr.mxu0 %v305
        %633 = vmatpush1.msra.mxu0 %v304
        %634 = vmatprep.subr.mxu0 %v309
        %635 = vmatpush1.msra.mxu0 %v308
        %636 = vmatprep.subr.mxu0 %v313
        %637 = vmatpush1.msra.mxu0 %v312
        %638 = vmatprep.subr.mxu0 %v317
        %639 = vmatpush1.msra.mxu0 %v316
        %640 = vmatprep.subr.mxu0 %v321
        %641 = vmatpush1.msra.mxu0 %v320
        %642 = vmatprep.subr.mxu0 %v325
        %643 = vmatpush1.msra.mxu0 %v324
        %644 = vmatprep.subr.mxu0 %v329
        %645 = vmatpush1.msra.mxu0 %v328
        %646 = vmatprep.subr.mxu0 %v333
        %647 = vmatpush1.msra.mxu0 %v332
        %648 = vmatprep.subr.mxu0 %v337
        %649 = vmatpush1.msra.mxu0 %v336
        %650 = vmatprep.subr.mxu0 %v341
        %651 = vmatpush1.msra.mxu0 %v340
        %652 = vmatprep.subr.mxu0 %v345
        %653 = vmatpush1.msra.mxu0 %v344
        %654 = vmatprep.subr.mxu0 %v349
        %655 = vmatpush1.msra.mxu0 %v348
        %656 = vmatprep.subr.mxu0 %v353
        %657 = vmatpush1.msra.mxu0 %v352
        %658 = vmatprep.subr.mxu0 %v357
        %659 = vmatpush1.msra.mxu0 %v356
        %660 = vmatprep.subr.mxu0 0.0
        %661 = vmatpush1.msra.mxu0 0.0
        %662 = vmatprep.subr.mxu0 0.0
        %663 = vmatpush1.msra.mxu0 0.0
        %664 = vmatprep.subr.mxu0 0.0
        %665 = vmatpush1.msra.mxu0 0.0
        %666 = vmatprep.subr.mxu0 0.0
        %667 = vmatpush1.msra.mxu0 0.0
        %668 = vmatprep.subr.mxu0 0.0
        %669 = vmatpush1.msra.mxu0 0.0
        %670 = vmatprep.subr.mxu0 0.0
        %671 = vmatpush1.msra.mxu0 0.0
        %672 = vmatprep.subr.mxu0 0.0
        %673 = vmatpush1.msra.mxu0 0.0
        %674 = vmatprep.subr.mxu0 0.0
        %675 = vmatpush1.msra.mxu0 0.0
        %676 = vmatprep.subr.mxu0 0.0
        %677 = vmatpush1.msra.mxu0 0.0
        %678 = vmatprep.subr.mxu0 0.0
        %679 = vmatpush1.msra.mxu0 0.0
        %680 = vmatprep.subr.mxu0 0.0
        %681 = vmatpush1.msra.mxu0 0.0
        %682 = vmatprep.subr.mxu0 0.0
        %683 = vmatpush1.msra.mxu0 0.0
        %684 = vmatprep.subr.mxu0 0.0
        %685 = vmatpush1.msra.mxu0 0.0
        %686 = vmatprep.subr.mxu0 0.0
        %687 = vmatpush1.msra.mxu0 0.0
        %688 = vmatprep.subr.mxu0 0.0
        %689 = vmatpush1.msra.mxu0 0.0
        %690 = vmatprep.subr.mxu0 0.0
        %691 = vmatpush1.msra.mxu0 0.0
        %692 = vmatprep.mubr.f32.mxu0 0.0
        %693 = vmatmul.mubr.f32.gmra.mrb[0].mxu0 %v551
        %v694 = vpop.f32.mrb[0].mxu0
        %v695 = vadd.f32 0.0, %v694
        %v696 = vpop.f32.mrb[0].mxu0
        %v697 = vadd.f32 0.0, %v696
        %698 = vdwg.mxu0
        %v703 = vcombine.low %v624, %v626
        %v704 = vcombine.low %v695, %v697
        %v706 = vunpack.c.l.s4 1983009808
        %v707 = vunpack.c.0.s8 %v706
        %v708 = vlaneseq
        %v709 = vshrl.u32 %v708, 7
        %v710 = vsub.s32 %v707, %v709
        %v711 = vrot.slane %v703, %v710
        %v713 = vunpack.c.l.s4 1983009808
        %v714 = vunpack.c.0.s8 %v713
        %v715 = vlaneseq
        %v716 = vshrl.u32 %v715, 7
        %v717 = vsub.s32 %v714, %v716
        %v718 = vrot.slane %v704, %v717
        %v719 = vcombine.low %v711, %v718
        %v721 = vadd.f32 %v556, %v719
        %v722 = vmul.f32 %v721, 0.5
        %v723 = vtanh.pop %v722
        %v724 = vadd.f32 %v723, 1.0
        %v725 = vmul.f32 %v724, 0.5
        %v727 = vrot.slane %v721, 2
        %v729 = vmul.f32 %v727, 0.5
        %v730 = vtanh.pop %v729
        %v731 = vadd.f32 %v730, 1.0
        %v732 = vmul.f32 %v731, 0.5
        %v733 = vrot.slane %v721, 4
        %v735 = vmul.f32 %v733, 0.5
        %v736 = vtanh.pop %v735
        %v737 = vadd.f32 %v736, 1.0
        %v738 = vmul.f32 %v737, 0.5
        %v739 = vrot.slane %v721, 6
        %v741 = vmul.f32 %v739, 0.5
        %v742 = vtanh.pop %v741
        %v743 = vadd.f32 %v742, 1.0
        %v744 = vmul.f32 %v743, 0.5
        %v745 = vmul.f32 %v553, %v732
        %v746 = vmul.f32 %v725, %v738
        %v747 = vadd.f32 %v745, %v746
        %v748 = vtanh.pop %v747
        %v749 = vmul.f32 %v744, %v748
        %s750 = scalar_lea.vmem %s275, 2 [#allocation9]
        %751 = vst [vmem:[%s750] sm:$0x3] %v747
        %s752 = scalar_lea.vmem %s239, 16 [#allocation4]
        %v753 = vld [vmem:[%s752] sm:$0xff]
        %754 = vmatprep.subr.mxu0 %v295
        %755 = vmatpush1.msra.mxu0 %v294
        %756 = vmatprep.subr.mxu0 %v299
        %757 = vmatpush1.msra.mxu0 %v298
        %758 = vmatprep.subr.mxu0 %v303
        %759 = vmatpush1.msra.mxu0 %v302
        %760 = vmatprep.subr.mxu0 %v307
        %761 = vmatpush1.msra.mxu0 %v306
        %762 = vmatprep.subr.mxu0 %v311
        %763 = vmatpush1.msra.mxu0 %v310
        %764 = vmatprep.subr.mxu0 %v315
        %765 = vmatpush1.msra.mxu0 %v314
        %766 = vmatprep.subr.mxu0 %v319
        %767 = vmatpush1.msra.mxu0 %v318
        %768 = vmatprep.subr.mxu0 %v323
        %769 = vmatpush1.msra.mxu0 %v322
        %770 = vmatprep.subr.mxu0 %v327
        %771 = vmatpush1.msra.mxu0 %v326
        %772 = vmatprep.subr.mxu0 %v331
        %773 = vmatpush1.msra.mxu0 %v330
        %774 = vmatprep.subr.mxu0 %v335
        %775 = vmatpush1.msra.mxu0 %v334
        %776 = vmatprep.subr.mxu0 %v339
        %777 = vmatpush1.msra.mxu0 %v338
        %778 = vmatprep.subr.mxu0 %v343
        %779 = vmatpush1.msra.mxu0 %v342
        %780 = vmatprep.subr.mxu0 %v347
        %781 = vmatpush1.msra.mxu0 %v346
        %782 = vmatprep.subr.mxu0 %v351
        %783 = vmatpush1.msra.mxu0 %v350
        %784 = vmatprep.subr.mxu0 %v355
        %785 = vmatpush1.msra.mxu0 %v354
        %786 = vmatprep.subr.mxu0 0.0
        %787 = vmatpush1.msra.mxu0 0.0
        %788 = vmatprep.subr.mxu0 0.0
        %789 = vmatpush1.msra.mxu0 0.0
        %790 = vmatprep.subr.mxu0 0.0
        %791 = vmatpush1.msra.mxu0 0.0
        %792 = vmatprep.subr.mxu0 0.0
        %793 = vmatpush1.msra.mxu0 0.0
        %794 = vmatprep.subr.mxu0 0.0
        %795 = vmatpush1.msra.mxu0 0.0
        %796 = vmatprep.subr.mxu0 0.0
        %797 = vmatpush1.msra.mxu0 0.0
        %798 = vmatprep.subr.mxu0 0.0
        %799 = vmatpush1.msra.mxu0 0.0
        %800 = vmatprep.subr.mxu0 0.0
        %801 = vmatpush1.msra.mxu0 0.0
        %802 = vmatprep.subr.mxu0 0.0
        %803 = vmatpush1.msra.mxu0 0.0
        %804 = vmatprep.subr.mxu0 0.0
        %805 = vmatpush1.msra.mxu0 0.0
        %806 = vmatprep.subr.mxu0 0.0
        %807 = vmatpush1.msra.mxu0 0.0
        %808 = vmatprep.subr.mxu0 0.0
        %809 = vmatpush1.msra.mxu0 0.0
        %810 = vmatprep.subr.mxu0 0.0
        %811 = vmatpush1.msra.mxu0 0.0
        %812 = vmatprep.subr.mxu0 0.0
        %813 = vmatpush1.msra.mxu0 0.0
        %814 = vmatprep.subr.mxu0 0.0
        %815 = vmatpush1.msra.mxu0 0.0
        %816 = vmatprep.subr.mxu0 0.0
        %817 = vmatpush1.msra.mxu0 0.0
        %818 = vmatprep.mubr.f32.mxu0 0.0
        %819 = vmatmul.mubr.f32.gmra.mrb[0].mxu0 %v747
        %v820 = vpop.f32.mrb[0].mxu0
        %v821 = vadd.f32 0.0, %v820
        %v822 = vpop.f32.mrb[0].mxu0
        %v823 = vadd.f32 0.0, %v822
        %824 = vdwg.mxu0
        %825 = vmatprep.subr.mxu0 %v297
        %826 = vmatpush1.msra.mxu0 %v296
        %827 = vmatprep.subr.mxu0 %v301
        %828 = vmatpush1.msra.mxu0 %v300
        %829 = vmatprep.subr.mxu0 %v305
        %830 = vmatpush1.msra.mxu0 %v304
        %831 = vmatprep.subr.mxu0 %v309
        %832 = vmatpush1.msra.mxu0 %v308
        %833 = vmatprep.subr.mxu0 %v313
        %834 = vmatpush1.msra.mxu0 %v312
        %835 = vmatprep.subr.mxu0 %v317
        %836 = vmatpush1.msra.mxu0 %v316
        %837 = vmatprep.subr.mxu0 %v321
        %838 = vmatpush1.msra.mxu0 %v320
        %839 = vmatprep.subr.mxu0 %v325
        %840 = vmatpush1.msra.mxu0 %v324
        %841 = vmatprep.subr.mxu0 %v329
        %842 = vmatpush1.msra.mxu0 %v328
        %843 = vmatprep.subr.mxu0 %v333
        %844 = vmatpush1.msra.mxu0 %v332
        %845 = vmatprep.subr.mxu0 %v337
        %846 = vmatpush1.msra.mxu0 %v336
        %847 = vmatprep.subr.mxu0 %v341
        %848 = vmatpush1.msra.mxu0 %v340
        %849 = vmatprep.subr.mxu0 %v345
        %850 = vmatpush1.msra.mxu0 %v344
        %851 = vmatprep.subr.mxu0 %v349
        %852 = vmatpush1.msra.mxu0 %v348
        %853 = vmatprep.subr.mxu0 %v353
        %854 = vmatpush1.msra.mxu0 %v352
        %855 = vmatprep.subr.mxu0 %v357
        %856 = vmatpush1.msra.mxu0 %v356
        %857 = vmatprep.subr.mxu0 0.0
        %858 = vmatpush1.msra.mxu0 0.0
        %859 = vmatprep.subr.mxu0 0.0
        %860 = vmatpush1.msra.mxu0 0.0
        %861 = vmatprep.subr.mxu0 0.0
        %862 = vmatpush1.msra.mxu0 0.0
        %863 = vmatprep.subr.mxu0 0.0
        %864 = vmatpush1.msra.mxu0 0.0
        %865 = vmatprep.subr.mxu0 0.0
        %866 = vmatpush1.msra.mxu0 0.0
        %867 = vmatprep.subr.mxu0 0.0
        %868 = vmatpush1.msra.mxu0 0.0
        %869 = vmatprep.subr.mxu0 0.0
        %870 = vmatpush1.msra.mxu0 0.0
        %871 = vmatprep.subr.mxu0 0.0
        %872 = vmatpush1.msra.mxu0 0.0
        %873 = vmatprep.subr.mxu0 0.0
        %874 = vmatpush1.msra.mxu0 0.0
        %875 = vmatprep.subr.mxu0 0.0
        %876 = vmatpush1.msra.mxu0 0.0
        %877 = vmatprep.subr.mxu0 0.0
        %878 = vmatpush1.msra.mxu0 0.0
        %879 = vmatprep.subr.mxu0 0.0
        %880 = vmatpush1.msra.mxu0 0.0
        %881 = vmatprep.subr.mxu0 0.0
        %882 = vmatpush1.msra.mxu0 0.0
        %883 = vmatprep.subr.mxu0 0.0
        %884 = vmatpush1.msra.mxu0 0.0
        %885 = vmatprep.subr.mxu0 0.0
        %886 = vmatpush1.msra.mxu0 0.0
        %887 = vmatprep.subr.mxu0 0.0
        %888 = vmatpush1.msra.mxu0 0.0
        %889 = vmatprep.mubr.f32.mxu0 0.0
        %890 = vmatmul.mubr.f32.gmra.mrb[0].mxu0 %v747
        %v891 = vpop.f32.mrb[0].mxu0
        %v892 = vadd.f32 0.0, %v891
        %v893 = vpop.f32.mrb[0].mxu0
        %v894 = vadd.f32 0.0, %v893
        %895 = vdwg.mxu0
        %v900 = vcombine.low %v821, %v823
        %v901 = vcombine.low %v892, %v894
        %v903 = vunpack.c.l.s4 1983009808
        %v904 = vunpack.c.0.s8 %v903
        %v905 = vlaneseq
        %v906 = vshrl.u32 %v905, 7
        %v907 = vsub.s32 %v904, %v906
        %v908 = vrot.slane %v900, %v907
        %v910 = vunpack.c.l.s4 1983009808
        %v911 = vunpack.c.0.s8 %v910
        %v912 = vlaneseq
        %v913 = vshrl.u32 %v912, 7
        %v914 = vsub.s32 %v911, %v913
        %v915 = vrot.slane %v901, %v914
        %v916 = vcombine.low %v908, %v915
        %v918 = vadd.f32 %v753, %v916
        %v919 = vmul.f32 %v918, 0.5
        %v920 = vtanh.pop %v919
        %v921 = vadd.f32 %v920, 1.0
        %v922 = vmul.f32 %v921, 0.5
        %v924 = vrot.slane %v918, 2
        %v926 = vmul.f32 %v924, 0.5
        %v927 = vtanh.pop %v926
        %v928 = vadd.f32 %v927, 1.0
        %v929 = vmul.f32 %v928, 0.5
        %v930 = vrot.slane %v918, 4
        %v932 = vmul.f32 %v930, 0.5
        %v933 = vtanh.pop %v932
        %v934 = vadd.f32 %v933, 1.0
        %v935 = vmul.f32 %v934, 0.5
        %v936 = vrot.slane %v918, 6
        %v938 = vmul.f32 %v936, 0.5
        %v939 = vtanh.pop %v938
        %v940 = vadd.f32 %v939, 1.0
        %v941 = vmul.f32 %v940, 0.5
        %v942 = vmul.f32 %v749, %v929
        %v943 = vmul.f32 %v922, %v935
        %v944 = vadd.f32 %v942, %v943
        %v945 = vtanh.pop %v944
        %v946 = vmul.f32 %v941, %v945
        %s947 = scalar_lea.vmem %s275, 4 [#allocation9]
        %948 = vst [vmem:[%s947] sm:$0x3] %v944
        %s949 = scalar_lea.vmem %s239, 24 [#allocation4]
        %v950 = vld [vmem:[%s949] sm:$0xff]
        %951 = vmatprep.subr.mxu0 %v295
        %952 = vmatpush1.msra.mxu0 %v294
        %953 = vmatprep.subr.mxu0 %v299
        %954 = vmatpush1.msra.mxu0 %v298
        %955 = vmatprep.subr.mxu0 %v303
        %956 = vmatpush1.msra.mxu0 %v302
        %957 = vmatprep.subr.mxu0 %v307
        %958 = vmatpush1.msra.mxu0 %v306
        %959 = vmatprep.subr.mxu0 %v311
        %960 = vmatpush1.msra.mxu0 %v310
        %961 = vmatprep.subr.mxu0 %v315
        %962 = vmatpush1.msra.mxu0 %v314
        %963 = vmatprep.subr.mxu0 %v319
        %964 = vmatpush1.msra.mxu0 %v318
        %965 = vmatprep.subr.mxu0 %v323
        %966 = vmatpush1.msra.mxu0 %v322
        %967 = vmatprep.subr.mxu0 %v327
        %968 = vmatpush1.msra.mxu0 %v326
        %969 = vmatprep.subr.mxu0 %v331
        %970 = vmatpush1.msra.mxu0 %v330
        %971 = vmatprep.subr.mxu0 %v335
        %972 = vmatpush1.msra.mxu0 %v334
        %973 = vmatprep.subr.mxu0 %v339
        %974 = vmatpush1.msra.mxu0 %v338
        %975 = vmatprep.subr.mxu0 %v343
        %976 = vmatpush1.msra.mxu0 %v342
        %977 = vmatprep.subr.mxu0 %v347
        %978 = vmatpush1.msra.mxu0 %v346
        %979 = vmatprep.subr.mxu0 %v351
        %980 = vmatpush1.msra.mxu0 %v350
        %981 = vmatprep.subr.mxu0 %v355
        %982 = vmatpush1.msra.mxu0 %v354
        %983 = vmatprep.subr.mxu0 0.0
        %984 = vmatpush1.msra.mxu0 0.0
        %985 = vmatprep.subr.mxu0 0.0
        %986 = vmatpush1.msra.mxu0 0.0
        %987 = vmatprep.subr.mxu0 0.0
        %988 = vmatpush1.msra.mxu0 0.0
        %989 = vmatprep.subr.mxu0 0.0
        %990 = vmatpush1.msra.mxu0 0.0
        %991 = vmatprep.subr.mxu0 0.0
        %992 = vmatpush1.msra.mxu0 0.0
        %993 = vmatprep.subr.mxu0 0.0
        %994 = vmatpush1.msra.mxu0 0.0
        %995 = vmatprep.subr.mxu0 0.0
        %996 = vmatpush1.msra.mxu0 0.0
        %997 = vmatprep.subr.mxu0 0.0
        %998 = vmatpush1.msra.mxu0 0.0
        %999 = vmatprep.subr.mxu0 0.0
        %1000 = vmatpush1.msra.mxu0 0.0
        %1001 = vmatprep.subr.mxu0 0.0
        %1002 = vmatpush1.msra.mxu0 0.0
        %1003 = vmatprep.subr.mxu0 0.0
        %1004 = vmatpush1.msra.mxu0 0.0
        %1005 = vmatprep.subr.mxu0 0.0
        %1006 = vmatpush1.msra.mxu0 0.0
        %1007 = vmatprep.subr.mxu0 0.0
        %1008 = vmatpush1.msra.mxu0 0.0
        %1009 = vmatprep.subr.mxu0 0.0
        %1010 = vmatpush1.msra.mxu0 0.0
        %1011 = vmatprep.subr.mxu0 0.0
        %1012 = vmatpush1.msra.mxu0 0.0
        %1013 = vmatprep.subr.mxu0 0.0
        %1014 = vmatpush1.msra.mxu0 0.0
        %1015 = vmatprep.mubr.f32.mxu0 0.0
        %1016 = vmatmul.mubr.f32.gmra.mrb[0].mxu0 %v944
        %v1017 = vpop.f32.mrb[0].mxu0
        %v1018 = vadd.f32 0.0, %v1017
        %v1019 = vpop.f32.mrb[0].mxu0
        %v1020 = vadd.f32 0.0, %v1019
        %1021 = vdwg.mxu0
        %1022 = vmatprep.subr.mxu0 %v297
        %1023 = vmatpush1.msra.mxu0 %v296
        %1024 = vmatprep.subr.mxu0 %v301
        %1025 = vmatpush1.msra.mxu0 %v300
        %1026 = vmatprep.subr.mxu0 %v305
        %1027 = vmatpush1.msra.mxu0 %v304
        %1028 = vmatprep.subr.mxu0 %v309
        %1029 = vmatpush1.msra.mxu0 %v308
        %1030 = vmatprep.subr.mxu0 %v313
        %1031 = vmatpush1.msra.mxu0 %v312
        %1032 = vmatprep.subr.mxu0 %v317
        %1033 = vmatpush1.msra.mxu0 %v316
        %1034 = vmatprep.subr.mxu0 %v321
        %1035 = vmatpush1.msra.mxu0 %v320
        %1036 = vmatprep.subr.mxu0 %v325
        %1037 = vmatpush1.msra.mxu0 %v324
        %1038 = vmatprep.subr.mxu0 %v329
        %1039 = vmatpush1.msra.mxu0 %v328
        %1040 = vmatprep.subr.mxu0 %v333
        %1041 = vmatpush1.msra.mxu0 %v332
        %1042 = vmatprep.subr.mxu0 %v337
        %1043 = vmatpush1.msra.mxu0 %v336
        %1044 = vmatprep.subr.mxu0 %v341
        %1045 = vmatpush1.msra.mxu0 %v340
        %1046 = vmatprep.subr.mxu0 %v345
        %1047 = vmatpush1.msra.mxu0 %v344
        %1048 = vmatprep.subr.mxu0 %v349
        %1049 = vmatpush1.msra.mxu0 %v348
        %1050 = vmatprep.subr.mxu0 %v353
        %1051 = vmatpush1.msra.mxu0 %v352
        %1052 = vmatprep.subr.mxu0 %v357
        %1053 = vmatpush1.msra.mxu0 %v356
        %1054 = vmatprep.subr.mxu0 0.0
        %1055 = vmatpush1.msra.mxu0 0.0
        %1056 = vmatprep.subr.mxu0 0.0
        %1057 = vmatpush1.msra.mxu0 0.0
        %1058 = vmatprep.subr.mxu0 0.0
        %1059 = vmatpush1.msra.mxu0 0.0
        %1060 = vmatprep.subr.mxu0 0.0
        %1061 = vmatpush1.msra.mxu0 0.0
        %1062 = vmatprep.subr.mxu0 0.0
        %1063 = vmatpush1.msra.mxu0 0.0
        %1064 = vmatprep.subr.mxu0 0.0
        %1065 = vmatpush1.msra.mxu0 0.0
        %1066 = vmatprep.subr.mxu0 0.0
        %1067 = vmatpush1.msra.mxu0 0.0
        %1068 = vmatprep.subr.mxu0 0.0
        %1069 = vmatpush1.msra.mxu0 0.0
        %1070 = vmatprep.subr.mxu0 0.0
        %1071 = vmatpush1.msra.mxu0 0.0
        %1072 = vmatprep.subr.mxu0 0.0
        %1073 = vmatpush1.msra.mxu0 0.0
        %1074 = vmatprep.subr.mxu0 0.0
        %1075 = vmatpush1.msra.mxu0 0.0
        %1076 = vmatprep.subr.mxu0 0.0
        %1077 = vmatpush1.msra.mxu0 0.0
        %1078 = vmatprep.subr.mxu0 0.0
        %1079 = vmatpush1.msra.mxu0 0.0
        %1080 = vmatprep.subr.mxu0 0.0
        %1081 = vmatpush1.msra.mxu0 0.0
        %1082 = vmatprep.subr.mxu0 0.0
        %1083 = vmatpush1.msra.mxu0 0.0
        %1084 = vmatprep.subr.mxu0 0.0
        %1085 = vmatpush1.msra.mxu0 0.0
        %1086 = vmatprep.mubr.f32.mxu0 0.0
        %1087 = vmatmul.mubr.f32.gmra.mrb[0].mxu0 %v944
        %v1088 = vpop.f32.mrb[0].mxu0
        %v1089 = vadd.f32 0.0, %v1088
        %v1090 = vpop.f32.mrb[0].mxu0
        %v1091 = vadd.f32 0.0, %v1090
        %1092 = vdwg.mxu0
        %v1097 = vcombine.low %v1018, %v1020
        %v1098 = vcombine.low %v1089, %v1091
        %v1100 = vunpack.c.l.s4 1983009808
        %v1101 = vunpack.c.0.s8 %v1100
        %v1102 = vlaneseq
        %v1103 = vshrl.u32 %v1102, 7
        %v1104 = vsub.s32 %v1101, %v1103
        %v1105 = vrot.slane %v1097, %v1104
        %v1107 = vunpack.c.l.s4 1983009808
        %v1108 = vunpack.c.0.s8 %v1107
        %v1109 = vlaneseq
        %v1110 = vshrl.u32 %v1109, 7
        %v1111 = vsub.s32 %v1108, %v1110
        %v1112 = vrot.slane %v1098, %v1111
        %v1113 = vcombine.low %v1105, %v1112
        %v1115 = vadd.f32 %v950, %v1113
        %v1116 = vmul.f32 %v1115, 0.5
        %v1117 = vtanh.pop %v1116
        %v1118 = vadd.f32 %v1117, 1.0
        %v1119 = vmul.f32 %v1118, 0.5
        %v1121 = vrot.slane %v1115, 2
        %v1123 = vmul.f32 %v1121, 0.5
        %v1124 = vtanh.pop %v1123
        %v1125 = vadd.f32 %v1124, 1.0
        %v1126 = vmul.f32 %v1125, 0.5
        %v1127 = vrot.slane %v1115, 4
        %v1129 = vmul.f32 %v1127, 0.5
        %v1130 = vtanh.pop %v1129
        %v1131 = vadd.f32 %v1130, 1.0
        %v1132 = vmul.f32 %v1131, 0.5
        %v1133 = vrot.slane %v1115, 6
        %v1135 = vmul.f32 %v1133, 0.5
        %v1136 = vtanh.pop %v1135
        %v1137 = vadd.f32 %v1136, 1.0
        %v1138 = vmul.f32 %v1137, 0.5
        %v1139 = vmul.f32 %v946, %v1126
        %v1140 = vmul.f32 %v1119, %v1132
        %v1141 = vadd.f32 %v1139, %v1140
        %v1142 = vtanh.pop %v1141
        %v1143 = vmul.f32 %v1138, %v1142
        %s1144 = scalar_lea.vmem %s275, 6 [#allocation9]
        %1145 = vst [vmem:[%s1144] sm:$0x3] %v1141
        %s1146 = scalar_lea.vmem %s239, 32 [#allocation4]
        %v1147 = vld [vmem:[%s1146] sm:$0xff]
        %1148 = vmatprep.subr.mxu0 %v295
        %1149 = vmatpush1.msra.mxu0 %v294
        %1150 = vmatprep.subr.mxu0 %v299
        %1151 = vmatpush1.msra.mxu0 %v298
        %1152 = vmatprep.subr.mxu0 %v303
        %1153 = vmatpush1.msra.mxu0 %v302
        %1154 = vmatprep.subr.mxu0 %v307
        %1155 = vmatpush1.msra.mxu0 %v306
        %1156 = vmatprep.subr.mxu0 %v311
        %1157 = vmatpush1.msra.mxu0 %v310
        %1158 = vmatprep.subr.mxu0 %v315
        %1159 = vmatpush1.msra.mxu0 %v314
        %1160 = vmatprep.subr.mxu0 %v319
        %1161 = vmatpush1.msra.mxu0 %v318
        %1162 = vmatprep.subr.mxu0 %v323
        %1163 = vmatpush1.msra.mxu0 %v322
        %1164 = vmatprep.subr.mxu0 %v327
        %1165 = vmatpush1.msra.mxu0 %v326
        %1166 = vmatprep.subr.mxu0 %v331
        %1167 = vmatpush1.msra.mxu0 %v330
        %1168 = vmatprep.subr.mxu0 %v335
        %1169 = vmatpush1.msra.mxu0 %v334
        %1170 = vmatprep.subr.mxu0 %v339
        %1171 = vmatpush1.msra.mxu0 %v338
        %1172 = vmatprep.subr.mxu0 %v343
        %1173 = vmatpush1.msra.mxu0 %v342
        %1174 = vmatprep.subr.mxu0 %v347
        %1175 = vmatpush1.msra.mxu0 %v346
        %1176 = vmatprep.subr.mxu0 %v351
        %1177 = vmatpush1.msra.mxu0 %v350
        %1178 = vmatprep.subr.mxu0 %v355
        %1179 = vmatpush1.msra.mxu0 %v354
        %1180 = vmatprep.subr.mxu0 0.0
        %1181 = vmatpush1.msra.mxu0 0.0
        %1182 = vmatprep.subr.mxu0 0.0
        %1183 = vmatpush1.msra.mxu0 0.0
        %1184 = vmatprep.subr.mxu0 0.0
        %1185 = vmatpush1.msra.mxu0 0.0
        %1186 = vmatprep.subr.mxu0 0.0
        %1187 = vmatpush1.msra.mxu0 0.0
        %1188 = vmatprep.subr.mxu0 0.0
        %1189 = vmatpush1.msra.mxu0 0.0
        %1190 = vmatprep.subr.mxu0 0.0
        %1191 = vmatpush1.msra.mxu0 0.0
        %1192 = vmatprep.subr.mxu0 0.0
        %1193 = vmatpush1.msra.mxu0 0.0
        %1194 = vmatprep.subr.mxu0 0.0
        %1195 = vmatpush1.msra.mxu0 0.0
        %1196 = vmatprep.subr.mxu0 0.0
        %1197 = vmatpush1.msra.mxu0 0.0
        %1198 = vmatprep.subr.mxu0 0.0
        %1199 = vmatpush1.msra.mxu0 0.0
        %1200 = vmatprep.subr.mxu0 0.0
        %1201 = vmatpush1.msra.mxu0 0.0
        %1202 = vmatprep.subr.mxu0 0.0
        %1203 = vmatpush1.msra.mxu0 0.0
        %1204 = vmatprep.subr.mxu0 0.0
        %1205 = vmatpush1.msra.mxu0 0.0
        %1206 = vmatprep.subr.mxu0 0.0
        %1207 = vmatpush1.msra.mxu0 0.0
        %1208 = vmatprep.subr.mxu0 0.0
        %1209 = vmatpush1.msra.mxu0 0.0
        %1210 = vmatprep.subr.mxu0 0.0
        %1211 = vmatpush1.msra.mxu0 0.0
        %1212 = vmatprep.mubr.f32.mxu0 0.0
        %1213 = vmatmul.mubr.f32.gmra.mrb[0].mxu0 %v1141
        %v1214 = vpop.f32.mrb[0].mxu0
        %v1215 = vadd.f32 0.0, %v1214
        %v1216 = vpop.f32.mrb[0].mxu0
        %v1217 = vadd.f32 0.0, %v1216
        %1218 = vdwg.mxu0
        %1219 = vmatprep.subr.mxu0 %v297
        %1220 = vmatpush1.msra.mxu0 %v296
        %1221 = vmatprep.subr.mxu0 %v301
        %1222 = vmatpush1.msra.mxu0 %v300
        %1223 = vmatprep.subr.mxu0 %v305
        %1224 = vmatpush1.msra.mxu0 %v304
        %1225 = vmatprep.subr.mxu0 %v309
        %1226 = vmatpush1.msra.mxu0 %v308
        %1227 = vmatprep.subr.mxu0 %v313
        %1228 = vmatpush1.msra.mxu0 %v312
        %1229 = vmatprep.subr.mxu0 %v317
        %1230 = vmatpush1.msra.mxu0 %v316
        %1231 = vmatprep.subr.mxu0 %v321
        %1232 = vmatpush1.msra.mxu0 %v320
        %1233 = vmatprep.subr.mxu0 %v325
        %1234 = vmatpush1.msra.mxu0 %v324
        %1235 = vmatprep.subr.mxu0 %v329
        %1236 = vmatpush1.msra.mxu0 %v328
        %1237 = vmatprep.subr.mxu0 %v333
        %1238 = vmatpush1.msra.mxu0 %v332
        %1239 = vmatprep.subr.mxu0 %v337
        %1240 = vmatpush1.msra.mxu0 %v336
        %1241 = vmatprep.subr.mxu0 %v341
        %1242 = vmatpush1.msra.mxu0 %v340
        %1243 = vmatprep.subr.mxu0 %v345
        %1244 = vmatpush1.msra.mxu0 %v344
        %1245 = vmatprep.subr.mxu0 %v349
        %1246 = vmatpush1.msra.mxu0 %v348
        %1247 = vmatprep.subr.mxu0 %v353
        %1248 = vmatpush1.msra.mxu0 %v352
        %1249 = vmatprep.subr.mxu0 %v357
        %1250 = vmatpush1.msra.mxu0 %v356
        %1251 = vmatprep.subr.mxu0 0.0
        %1252 = vmatpush1.msra.mxu0 0.0
        %1253 = vmatprep.subr.mxu0 0.0
        %1254 = vmatpush1.msra.mxu0 0.0
        %1255 = vmatprep.subr.mxu0 0.0
        %1256 = vmatpush1.msra.mxu0 0.0
        %1257 = vmatprep.subr.mxu0 0.0
        %1258 = vmatpush1.msra.mxu0 0.0
        %1259 = vmatprep.subr.mxu0 0.0
        %1260 = vmatpush1.msra.mxu0 0.0
        %1261 = vmatprep.subr.mxu0 0.0
        %1262 = vmatpush1.msra.mxu0 0.0
        %1263 = vmatprep.subr.mxu0 0.0
        %1264 = vmatpush1.msra.mxu0 0.0
        %1265 = vmatprep.subr.mxu0 0.0
        %1266 = vmatpush1.msra.mxu0 0.0
        %1267 = vmatprep.subr.mxu0 0.0
        %1268 = vmatpush1.msra.mxu0 0.0
        %1269 = vmatprep.subr.mxu0 0.0
        %1270 = vmatpush1.msra.mxu0 0.0
        %1271 = vmatprep.subr.mxu0 0.0
        %1272 = vmatpush1.msra.mxu0 0.0
        %1273 = vmatprep.subr.mxu0 0.0
        %1274 = vmatpush1.msra.mxu0 0.0
        %1275 = vmatprep.subr.mxu0 0.0
        %1276 = vmatpush1.msra.mxu0 0.0
        %1277 = vmatprep.subr.mxu0 0.0
        %1278 = vmatpush1.msra.mxu0 0.0
        %1279 = vmatprep.subr.mxu0 0.0
        %1280 = vmatpush1.msra.mxu0 0.0
        %1281 = vmatprep.subr.mxu0 0.0
        %1282 = vmatpush1.msra.mxu0 0.0
        %1283 = vmatprep.mubr.f32.mxu0 0.0
        %1284 = vmatmul.mubr.f32.gmra.mrb[0].mxu0 %v1141
        %v1285 = vpop.f32.mrb[0].mxu0
        %v1286 = vadd.f32 0.0, %v1285
        %v1287 = vpop.f32.mrb[0].mxu0
        %v1288 = vadd.f32 0.0, %v1287
        %1289 = vdwg.mxu0
        %v1294 = vcombine.low %v1215, %v1217
        %v1295 = vcombine.low %v1286, %v1288
        %v1297 = vunpack.c.l.s4 1983009808
        %v1298 = vunpack.c.0.s8 %v1297
        %v1299 = vlaneseq
        %v1300 = vshrl.u32 %v1299, 7
        %v1301 = vsub.s32 %v1298, %v1300
        %v1302 = vrot.slane %v1294, %v1301
        %v1304 = vunpack.c.l.s4 1983009808
        %v1305 = vunpack.c.0.s8 %v1304
        %v1306 = vlaneseq
        %v1307 = vshrl.u32 %v1306, 7
        %v1308 = vsub.s32 %v1305, %v1307
        %v1309 = vrot.slane %v1295, %v1308
        %v1310 = vcombine.low %v1302, %v1309
        %v1312 = vadd.f32 %v1147, %v1310
        %v1313 = vmul.f32 %v1312, 0.5
        %v1314 = vtanh.pop %v1313
        %v1315 = vadd.f32 %v1314, 1.0
        %v1316 = vmul.f32 %v1315, 0.5
        %v1318 = vrot.slane %v1312, 2
        %v1320 = vmul.f32 %v1318, 0.5
        %v1321 = vtanh.pop %v1320
        %v1322 = vadd.f32 %v1321, 1.0
        %v1323 = vmul.f32 %v1322, 0.5
        %v1324 = vrot.slane %v1312, 4
        %v1326 = vmul.f32 %v1324, 0.5
        %v1327 = vtanh.pop %v1326
        %v1328 = vadd.f32 %v1327, 1.0
        %v1329 = vmul.f32 %v1328, 0.5
        %v1330 = vrot.slane %v1312, 6
        %v1332 = vmul.f32 %v1330, 0.5
        %v1333 = vtanh.pop %v1332
        %v1334 = vadd.f32 %v1333, 1.0
        %v1335 = vmul.f32 %v1334, 0.5
        %v1336 = vmul.f32 %v1143, %v1323
        %v1337 = vmul.f32 %v1316, %v1329
        %v1338 = vadd.f32 %v1336, %v1337
        %v1339 = vtanh.pop %v1338
        %v1340 = vmul.f32 %v1335, %v1339
        %s1341 = scalar_lea.vmem %s275, 8 [#allocation9]
        %1342 = vst [vmem:[%s1341] sm:$0x3] %v1338
        %s1343 = scalar_lea.vmem %s239, 40 [#allocation4]
        %v1344 = vld [vmem:[%s1343] sm:$0xff]
        %1345 = vmatprep.subr.mxu0 %v295
        %1346 = vmatpush1.msra.mxu0 %v294
        %1347 = vmatprep.subr.mxu0 %v299
        %1348 = vmatpush1.msra.mxu0 %v298
        %1349 = vmatprep.subr.mxu0 %v303
        %1350 = vmatpush1.msra.mxu0 %v302
        %1351 = vmatprep.subr.mxu0 %v307
        %1352 = vmatpush1.msra.mxu0 %v306
        %1353 = vmatprep.subr.mxu0 %v311
        %1354 = vmatpush1.msra.mxu0 %v310
        %1355 = vmatprep.subr.mxu0 %v315
        %1356 = vmatpush1.msra.mxu0 %v314
        %1357 = vmatprep.subr.mxu0 %v319
        %1358 = vmatpush1.msra.mxu0 %v318
        %1359 = vmatprep.subr.mxu0 %v323
        %1360 = vmatpush1.msra.mxu0 %v322
        %1361 = vmatprep.subr.mxu0 %v327
        %1362 = vmatpush1.msra.mxu0 %v326
        %1363 = vmatprep.subr.mxu0 %v331
        %1364 = vmatpush1.msra.mxu0 %v330
        %1365 = vmatprep.subr.mxu0 %v335
        %1366 = vmatpush1.msra.mxu0 %v334
        %1367 = vmatprep.subr.mxu0 %v339
        %1368 = vmatpush1.msra.mxu0 %v338
        %1369 = vmatprep.subr.mxu0 %v343
        %1370 = vmatpush1.msra.mxu0 %v342
        %1371 = vmatprep.subr.mxu0 %v347
        %1372 = vmatpush1.msra.mxu0 %v346
        %1373 = vmatprep.subr.mxu0 %v351
        %1374 = vmatpush1.msra.mxu0 %v350
        %1375 = vmatprep.subr.mxu0 %v355
        %1376 = vmatpush1.msra.mxu0 %v354
        %1377 = vmatprep.subr.mxu0 0.0
        %1378 = vmatpush1.msra.mxu0 0.0
        %1379 = vmatprep.subr.mxu0 0.0
        %1380 = vmatpush1.msra.mxu0 0.0
        %1381 = vmatprep.subr.mxu0 0.0
        %1382 = vmatpush1.msra.mxu0 0.0
        %1383 = vmatprep.subr.mxu0 0.0
        %1384 = vmatpush1.msra.mxu0 0.0
        %1385 = vmatprep.subr.mxu0 0.0
        %1386 = vmatpush1.msra.mxu0 0.0
        %1387 = vmatprep.subr.mxu0 0.0
        %1388 = vmatpush1.msra.mxu0 0.0
        %1389 = vmatprep.subr.mxu0 0.0
        %1390 = vmatpush1.msra.mxu0 0.0
        %1391 = vmatprep.subr.mxu0 0.0
        %1392 = vmatpush1.msra.mxu0 0.0
        %1393 = vmatprep.subr.mxu0 0.0
        %1394 = vmatpush1.msra.mxu0 0.0
        %1395 = vmatprep.subr.mxu0 0.0
        %1396 = vmatpush1.msra.mxu0 0.0
        %1397 = vmatprep.subr.mxu0 0.0
        %1398 = vmatpush1.msra.mxu0 0.0
        %1399 = vmatprep.subr.mxu0 0.0
        %1400 = vmatpush1.msra.mxu0 0.0
        %1401 = vmatprep.subr.mxu0 0.0
        %1402 = vmatpush1.msra.mxu0 0.0
        %1403 = vmatprep.subr.mxu0 0.0
        %1404 = vmatpush1.msra.mxu0 0.0
        %1405 = vmatprep.subr.mxu0 0.0
        %1406 = vmatpush1.msra.mxu0 0.0
        %1407 = vmatprep.subr.mxu0 0.0
        %1408 = vmatpush1.msra.mxu0 0.0
        %1409 = vmatprep.mubr.f32.mxu0 0.0
        %1410 = vmatmul.mubr.f32.gmra.mrb[0].mxu0 %v1338
        %v1411 = vpop.f32.mrb[0].mxu0
        %v1412 = vadd.f32 0.0, %v1411
        %v1413 = vpop.f32.mrb[0].mxu0
        %v1414 = vadd.f32 0.0, %v1413
        %1415 = vdwg.mxu0
        %1416 = vmatprep.subr.mxu0 %v297
        %1417 = vmatpush1.msra.mxu0 %v296
        %1418 = vmatprep.subr.mxu0 %v301
        %1419 = vmatpush1.msra.mxu0 %v300
        %1420 = vmatprep.subr.mxu0 %v305
        %1421 = vmatpush1.msra.mxu0 %v304
        %1422 = vmatprep.subr.mxu0 %v309
        %1423 = vmatpush1.msra.mxu0 %v308
        %1424 = vmatprep.subr.mxu0 %v313
        %1425 = vmatpush1.msra.mxu0 %v312
        %1426 = vmatprep.subr.mxu0 %v317
        %1427 = vmatpush1.msra.mxu0 %v316
        %1428 = vmatprep.subr.mxu0 %v321
        %1429 = vmatpush1.msra.mxu0 %v320
        %1430 = vmatprep.subr.mxu0 %v325
        %1431 = vmatpush1.msra.mxu0 %v324
        %1432 = vmatprep.subr.mxu0 %v329
        %1433 = vmatpush1.msra.mxu0 %v328
        %1434 = vmatprep.subr.mxu0 %v333
        %1435 = vmatpush1.msra.mxu0 %v332
        %1436 = vmatprep.subr.mxu0 %v337
        %1437 = vmatpush1.msra.mxu0 %v336
        %1438 = vmatprep.subr.mxu0 %v341
        %1439 = vmatpush1.msra.mxu0 %v340
        %1440 = vmatprep.subr.mxu0 %v345
        %1441 = vmatpush1.msra.mxu0 %v344
        %1442 = vmatprep.subr.mxu0 %v349
        %1443 = vmatpush1.msra.mxu0 %v348
        %1444 = vmatprep.subr.mxu0 %v353
        %1445 = vmatpush1.msra.mxu0 %v352
        %1446 = vmatprep.subr.mxu0 %v357
        %1447 = vmatpush1.msra.mxu0 %v356
        %1448 = vmatprep.subr.mxu0 0.0
        %1449 = vmatpush1.msra.mxu0 0.0
        %1450 = vmatprep.subr.mxu0 0.0
        %1451 = vmatpush1.msra.mxu0 0.0
        %1452 = vmatprep.subr.mxu0 0.0
        %1453 = vmatpush1.msra.mxu0 0.0
        %1454 = vmatprep.subr.mxu0 0.0
        %1455 = vmatpush1.msra.mxu0 0.0
        %1456 = vmatprep.subr.mxu0 0.0
        %1457 = vmatpush1.msra.mxu0 0.0
        %1458 = vmatprep.subr.mxu0 0.0
        %1459 = vmatpush1.msra.mxu0 0.0
        %1460 = vmatprep.subr.mxu0 0.0
        %1461 = vmatpush1.msra.mxu0 0.0
        %1462 = vmatprep.subr.mxu0 0.0
        %1463 = vmatpush1.msra.mxu0 0.0
        %1464 = vmatprep.subr.mxu0 0.0
        %1465 = vmatpush1.msra.mxu0 0.0
        %1466 = vmatprep.subr.mxu0 0.0
        %1467 = vmatpush1.msra.mxu0 0.0
        %1468 = vmatprep.subr.mxu0 0.0
        %1469 = vmatpush1.msra.mxu0 0.0
        %1470 = vmatprep.subr.mxu0 0.0
        %1471 = vmatpush1.msra.mxu0 0.0
        %1472 = vmatprep.subr.mxu0 0.0
        %1473 = vmatpush1.msra.mxu0 0.0
        %1474 = vmatprep.subr.mxu0 0.0
        %1475 = vmatpush1.msra.mxu0 0.0
        %1476 = vmatprep.subr.mxu0 0.0
        %1477 = vmatpush1.msra.mxu0 0.0
        %1478 = vmatprep.subr.mxu0 0.0
        %1479 = vmatpush1.msra.mxu0 0.0
        %1480 = vmatprep.mubr.f32.mxu0 0.0
        %1481 = vmatmul.mubr.f32.gmra.mrb[0].mxu0 %v1338
        %v1482 = vpop.f32.mrb[0].mxu0
        %v1483 = vadd.f32 0.0, %v1482
        %v1484 = vpop.f32.mrb[0].mxu0
        %v1485 = vadd.f32 0.0, %v1484
        %1486 = vdwg.mxu0
        %v1491 = vcombine.low %v1412, %v1414
        %v1492 = vcombine.low %v1483, %v1485
        %v1494 = vunpack.c.l.s4 1983009808
        %v1495 = vunpack.c.0.s8 %v1494
        %v1496 = vlaneseq
        %v1497 = vshrl.u32 %v1496, 7
        %v1498 = vsub.s32 %v1495, %v1497
        %v1499 = vrot.slane %v1491, %v1498
        %v1501 = vunpack.c.l.s4 1983009808
        %v1502 = vunpack.c.0.s8 %v1501
        %v1503 = vlaneseq
        %v1504 = vshrl.u32 %v1503, 7
        %v1505 = vsub.s32 %v1502, %v1504
        %v1506 = vrot.slane %v1492, %v1505
        %v1507 = vcombine.low %v1499, %v1506
        %v1509 = vadd.f32 %v1344, %v1507
        %v1510 = vmul.f32 %v1509, 0.5
        %v1511 = vtanh.pop %v1510
        %v1512 = vadd.f32 %v1511, 1.0
        %v1513 = vmul.f32 %v1512, 0.5
        %v1515 = vrot.slane %v1509, 2
        %v1517 = vmul.f32 %v1515, 0.5
        %v1518 = vtanh.pop %v1517
        %v1519 = vadd.f32 %v1518, 1.0
        %v1520 = vmul.f32 %v1519, 0.5
        %v1521 = vrot.slane %v1509, 4
        %v1523 = vmul.f32 %v1521, 0.5
        %v1524 = vtanh.pop %v1523
        %v1525 = vadd.f32 %v1524, 1.0
        %v1526 = vmul.f32 %v1525, 0.5
        %v1527 = vrot.slane %v1509, 6
        %v1529 = vmul.f32 %v1527, 0.5
        %v1530 = vtanh.pop %v1529
        %v1531 = vadd.f32 %v1530, 1.0
        %v1532 = vmul.f32 %v1531, 0.5
        %v1533 = vmul.f32 %v1340, %v1520
        %v1534 = vmul.f32 %v1513, %v1526
        %v1535 = vadd.f32 %v1533, %v1534
        %v1536 = vtanh.pop %v1535
        %v1537 = vmul.f32 %v1532, %v1536
        %s1538 = scalar_lea.vmem %s275, 10 [#allocation9]
        %1539 = vst [vmem:[%s1538] sm:$0x3] %v1535
        %s1540 = scalar_lea.vmem %s239, 48 [#allocation4]
        %v1541 = vld [vmem:[%s1540] sm:$0xff]
        %1542 = vmatprep.subr.mxu0 %v295
        %1543 = vmatpush1.msra.mxu0 %v294
        %1544 = vmatprep.subr.mxu0 %v299
        %1545 = vmatpush1.msra.mxu0 %v298
        %1546 = vmatprep.subr.mxu0 %v303
        %1547 = vmatpush1.msra.mxu0 %v302
        %1548 = vmatprep.subr.mxu0 %v307
        %1549 = vmatpush1.msra.mxu0 %v306
        %1550 = vmatprep.subr.mxu0 %v311
        %1551 = vmatpush1.msra.mxu0 %v310
        %1552 = vmatprep.subr.mxu0 %v315
        %1553 = vmatpush1.msra.mxu0 %v314
        %1554 = vmatprep.subr.mxu0 %v319
        %1555 = vmatpush1.msra.mxu0 %v318
        %1556 = vmatprep.subr.mxu0 %v323
        %1557 = vmatpush1.msra.mxu0 %v322
        %1558 = vmatprep.subr.mxu0 %v327
        %1559 = vmatpush1.msra.mxu0 %v326
        %1560 = vmatprep.subr.mxu0 %v331
        %1561 = vmatpush1.msra.mxu0 %v330
        %1562 = vmatprep.subr.mxu0 %v335
        %1563 = vmatpush1.msra.mxu0 %v334
        %1564 = vmatprep.subr.mxu0 %v339
        %1565 = vmatpush1.msra.mxu0 %v338
        %1566 = vmatprep.subr.mxu0 %v343
        %1567 = vmatpush1.msra.mxu0 %v342
        %1568 = vmatprep.subr.mxu0 %v347
        %1569 = vmatpush1.msra.mxu0 %v346
        %1570 = vmatprep.subr.mxu0 %v351
        %1571 = vmatpush1.msra.mxu0 %v350
        %1572 = vmatprep.subr.mxu0 %v355
        %1573 = vmatpush1.msra.mxu0 %v354
        %1574 = vmatprep.subr.mxu0 0.0
        %1575 = vmatpush1.msra.mxu0 0.0
        %1576 = vmatprep.subr.mxu0 0.0
        %1577 = vmatpush1.msra.mxu0 0.0
        %1578 = vmatprep.subr.mxu0 0.0
        %1579 = vmatpush1.msra.mxu0 0.0
        %1580 = vmatprep.subr.mxu0 0.0
        %1581 = vmatpush1.msra.mxu0 0.0
        %1582 = vmatprep.subr.mxu0 0.0
        %1583 = vmatpush1.msra.mxu0 0.0
        %1584 = vmatprep.subr.mxu0 0.0
        %1585 = vmatpush1.msra.mxu0 0.0
        %1586 = vmatprep.subr.mxu0 0.0
        %1587 = vmatpush1.msra.mxu0 0.0
        %1588 = vmatprep.subr.mxu0 0.0
        %1589 = vmatpush1.msra.mxu0 0.0
        %1590 = vmatprep.subr.mxu0 0.0
        %1591 = vmatpush1.msra.mxu0 0.0
        %1592 = vmatprep.subr.mxu0 0.0
        %1593 = vmatpush1.msra.mxu0 0.0
        %1594 = vmatprep.subr.mxu0 0.0
        %1595 = vmatpush1.msra.mxu0 0.0
        %1596 = vmatprep.subr.mxu0 0.0
        %1597 = vmatpush1.msra.mxu0 0.0
        %1598 = vmatprep.subr.mxu0 0.0
        %1599 = vmatpush1.msra.mxu0 0.0
        %1600 = vmatprep.subr.mxu0 0.0
        %1601 = vmatpush1.msra.mxu0 0.0
        %1602 = vmatprep.subr.mxu0 0.0
        %1603 = vmatpush1.msra.mxu0 0.0
        %1604 = vmatprep.subr.mxu0 0.0
        %1605 = vmatpush1.msra.mxu0 0.0
        %1606 = vmatprep.mubr.f32.mxu0 0.0
        %1607 = vmatmul.mubr.f32.gmra.mrb[0].mxu0 %v1535
        %v1608 = vpop.f32.mrb[0].mxu0
        %v1609 = vadd.f32 0.0, %v1608
        %v1610 = vpop.f32.mrb[0].mxu0
        %v1611 = vadd.f32 0.0, %v1610
        %1612 = vdwg.mxu0
        %1613 = vmatprep.subr.mxu0 %v297
        %1614 = vmatpush1.msra.mxu0 %v296
        %1615 = vmatprep.subr.mxu0 %v301
        %1616 = vmatpush1.msra.mxu0 %v300
        %1617 = vmatprep.subr.mxu0 %v305
        %1618 = vmatpush1.msra.mxu0 %v304
        %1619 = vmatprep.subr.mxu0 %v309
        %1620 = vmatpush1.msra.mxu0 %v308
        %1621 = vmatprep.subr.mxu0 %v313
        %1622 = vmatpush1.msra.mxu0 %v312
        %1623 = vmatprep.subr.mxu0 %v317
        %1624 = vmatpush1.msra.mxu0 %v316
        %1625 = vmatprep.subr.mxu0 %v321
        %1626 = vmatpush1.msra.mxu0 %v320
        %1627 = vmatprep.subr.mxu0 %v325
        %1628 = vmatpush1.msra.mxu0 %v324
        %1629 = vmatprep.subr.mxu0 %v329
        %1630 = vmatpush1.msra.mxu0 %v328
        %1631 = vmatprep.subr.mxu0 %v333
        %1632 = vmatpush1.msra.mxu0 %v332
        %1633 = vmatprep.subr.mxu0 %v337
        %1634 = vmatpush1.msra.mxu0 %v336
        %1635 = vmatprep.subr.mxu0 %v341
        %1636 = vmatpush1.msra.mxu0 %v340
        %1637 = vmatprep.subr.mxu0 %v345
        %1638 = vmatpush1.msra.mxu0 %v344
        %1639 = vmatprep.subr.mxu0 %v349
        %1640 = vmatpush1.msra.mxu0 %v348
        %1641 = vmatprep.subr.mxu0 %v353
        %1642 = vmatpush1.msra.mxu0 %v352
        %1643 = vmatprep.subr.mxu0 %v357
        %1644 = vmatpush1.msra.mxu0 %v356
        %1645 = vmatprep.subr.mxu0 0.0
        %1646 = vmatpush1.msra.mxu0 0.0
        %1647 = vmatprep.subr.mxu0 0.0
        %1648 = vmatpush1.msra.mxu0 0.0
        %1649 = vmatprep.subr.mxu0 0.0
        %1650 = vmatpush1.msra.mxu0 0.0
        %1651 = vmatprep.subr.mxu0 0.0
        %1652 = vmatpush1.msra.mxu0 0.0
        %1653 = vmatprep.subr.mxu0 0.0
        %1654 = vmatpush1.msra.mxu0 0.0
        %1655 = vmatprep.subr.mxu0 0.0
        %1656 = vmatpush1.msra.mxu0 0.0
        %1657 = vmatprep.subr.mxu0 0.0
        %1658 = vmatpush1.msra.mxu0 0.0
        %1659 = vmatprep.subr.mxu0 0.0
        %1660 = vmatpush1.msra.mxu0 0.0
        %1661 = vmatprep.subr.mxu0 0.0
        %1662 = vmatpush1.msra.mxu0 0.0
        %1663 = vmatprep.subr.mxu0 0.0
        %1664 = vmatpush1.msra.mxu0 0.0
        %1665 = vmatprep.subr.mxu0 0.0
        %1666 = vmatpush1.msra.mxu0 0.0
        %1667 = vmatprep.subr.mxu0 0.0
        %1668 = vmatpush1.msra.mxu0 0.0
        %1669 = vmatprep.subr.mxu0 0.0
        %1670 = vmatpush1.msra.mxu0 0.0
        %1671 = vmatprep.subr.mxu0 0.0
        %1672 = vmatpush1.msra.mxu0 0.0
        %1673 = vmatprep.subr.mxu0 0.0
        %1674 = vmatpush1.msra.mxu0 0.0
        %1675 = vmatprep.subr.mxu0 0.0
        %1676 = vmatpush1.msra.mxu0 0.0
        %1677 = vmatprep.mubr.f32.mxu0 0.0
        %1678 = vmatmul.mubr.f32.gmra.mrb[0].mxu0 %v1535
        %v1679 = vpop.f32.mrb[0].mxu0
        %v1680 = vadd.f32 0.0, %v1679
        %v1681 = vpop.f32.mrb[0].mxu0
        %v1682 = vadd.f32 0.0, %v1681
        %1683 = vdwg.mxu0
        %v1688 = vcombine.low %v1609, %v1611
        %v1689 = vcombine.low %v1680, %v1682
        %v1691 = vunpack.c.l.s4 1983009808
        %v1692 = vunpack.c.0.s8 %v1691
        %v1693 = vlaneseq
        %v1694 = vshrl.u32 %v1693, 7
        %v1695 = vsub.s32 %v1692, %v1694
        %v1696 = vrot.slane %v1688, %v1695
        %v1698 = vunpack.c.l.s4 1983009808
        %v1699 = vunpack.c.0.s8 %v1698
        %v1700 = vlaneseq
        %v1701 = vshrl.u32 %v1700, 7
        %v1702 = vsub.s32 %v1699, %v1701
        %v1703 = vrot.slane %v1689, %v1702
        %v1704 = vcombine.low %v1696, %v1703
        %v1706 = vadd.f32 %v1541, %v1704
        %v1707 = vmul.f32 %v1706, 0.5
        %v1708 = vtanh.pop %v1707
        %v1709 = vadd.f32 %v1708, 1.0
        %v1710 = vmul.f32 %v1709, 0.5
        %v1712 = vrot.slane %v1706, 2
        %v1714 = vmul.f32 %v1712, 0.5
        %v1715 = vtanh.pop %v1714
        %v1716 = vadd.f32 %v1715, 1.0
        %v1717 = vmul.f32 %v1716, 0.5
        %v1718 = vrot.slane %v1706, 4
        %v1720 = vmul.f32 %v1718, 0.5
        %v1721 = vtanh.pop %v1720
        %v1722 = vadd.f32 %v1721, 1.0
        %v1723 = vmul.f32 %v1722, 0.5
        %v1724 = vrot.slane %v1706, 6
        %v1726 = vmul.f32 %v1724, 0.5
        %v1727 = vtanh.pop %v1726
        %v1728 = vadd.f32 %v1727, 1.0
        %v1729 = vmul.f32 %v1728, 0.5
        %v1730 = vmul.f32 %v1537, %v1717
        %v1731 = vmul.f32 %v1710, %v1723
        %v1732 = vadd.f32 %v1730, %v1731
        %v1733 = vtanh.pop %v1732
        %v1734 = vmul.f32 %v1729, %v1733
        %s1735 = scalar_lea.vmem %s275, 12 [#allocation9]
        %1736 = vst [vmem:[%s1735] sm:$0x3] %v1732
        %s1737 = scalar_lea.vmem %s239, 56 [#allocation4]
        %v1738 = vld [vmem:[%s1737] sm:$0xff]
        %1739 = vmatprep.subr.mxu0 %v295
        %1740 = vmatpush1.msra.mxu0 %v294
        %1741 = vmatprep.subr.mxu0 %v299
        %1742 = vmatpush1.msra.mxu0 %v298
        %1743 = vmatprep.subr.mxu0 %v303
        %1744 = vmatpush1.msra.mxu0 %v302
        %1745 = vmatprep.subr.mxu0 %v307
        %1746 = vmatpush1.msra.mxu0 %v306
        %1747 = vmatprep.subr.mxu0 %v311
        %1748 = vmatpush1.msra.mxu0 %v310
        %1749 = vmatprep.subr.mxu0 %v315
        %1750 = vmatpush1.msra.mxu0 %v314
        %1751 = vmatprep.subr.mxu0 %v319
        %1752 = vmatpush1.msra.mxu0 %v318
        %1753 = vmatprep.subr.mxu0 %v323
        %1754 = vmatpush1.msra.mxu0 %v322
        %1755 = vmatprep.subr.mxu0 %v327
        %1756 = vmatpush1.msra.mxu0 %v326
        %1757 = vmatprep.subr.mxu0 %v331
        %1758 = vmatpush1.msra.mxu0 %v330
        %1759 = vmatprep.subr.mxu0 %v335
        %1760 = vmatpush1.msra.mxu0 %v334
        %1761 = vmatprep.subr.mxu0 %v339
        %1762 = vmatpush1.msra.mxu0 %v338
        %1763 = vmatprep.subr.mxu0 %v343
        %1764 = vmatpush1.msra.mxu0 %v342
        %1765 = vmatprep.subr.mxu0 %v347
        %1766 = vmatpush1.msra.mxu0 %v346
        %1767 = vmatprep.subr.mxu0 %v351
        %1768 = vmatpush1.msra.mxu0 %v350
        %1769 = vmatprep.subr.mxu0 %v355
        %1770 = vmatpush1.msra.mxu0 %v354
        %1771 = vmatprep.subr.mxu0 0.0
        %1772 = vmatpush1.msra.mxu0 0.0
        %1773 = vmatprep.subr.mxu0 0.0
        %1774 = vmatpush1.msra.mxu0 0.0
        %1775 = vmatprep.subr.mxu0 0.0
        %1776 = vmatpush1.msra.mxu0 0.0
        %1777 = vmatprep.subr.mxu0 0.0
        %1778 = vmatpush1.msra.mxu0 0.0
        %1779 = vmatprep.subr.mxu0 0.0
        %1780 = vmatpush1.msra.mxu0 0.0
        %1781 = vmatprep.subr.mxu0 0.0
        %1782 = vmatpush1.msra.mxu0 0.0
        %1783 = vmatprep.subr.mxu0 0.0
        %1784 = vmatpush1.msra.mxu0 0.0
        %1785 = vmatprep.subr.mxu0 0.0
        %1786 = vmatpush1.msra.mxu0 0.0
        %1787 = vmatprep.subr.mxu0 0.0
        %1788 = vmatpush1.msra.mxu0 0.0
        %1789 = vmatprep.subr.mxu0 0.0
        %1790 = vmatpush1.msra.mxu0 0.0
        %1791 = vmatprep.subr.mxu0 0.0
        %1792 = vmatpush1.msra.mxu0 0.0
        %1793 = vmatprep.subr.mxu0 0.0
        %1794 = vmatpush1.msra.mxu0 0.0
        %1795 = vmatprep.subr.mxu0 0.0
        %1796 = vmatpush1.msra.mxu0 0.0
        %1797 = vmatprep.subr.mxu0 0.0
        %1798 = vmatpush1.msra.mxu0 0.0
        %1799 = vmatprep.subr.mxu0 0.0
        %1800 = vmatpush1.msra.mxu0 0.0
        %1801 = vmatprep.subr.mxu0 0.0
        %1802 = vmatpush1.msra.mxu0 0.0
        %1803 = vmatprep.mubr.f32.mxu0 0.0
        %1804 = vmatmul.mubr.f32.gmra.mrb[0].mxu0 %v1732
        %v1805 = vpop.f32.mrb[0].mxu0
        %v1806 = vadd.f32 0.0, %v1805
        %v1807 = vpop.f32.mrb[0].mxu0
        %v1808 = vadd.f32 0.0, %v1807
        %1809 = vdwg.mxu0
        %1810 = vmatprep.subr.mxu0 %v297
        %1811 = vmatpush1.msra.mxu0 %v296
        %1812 = vmatprep.subr.mxu0 %v301
        %1813 = vmatpush1.msra.mxu0 %v300
        %1814 = vmatprep.subr.mxu0 %v305
        %1815 = vmatpush1.msra.mxu0 %v304
        %1816 = vmatprep.subr.mxu0 %v309
        %1817 = vmatpush1.msra.mxu0 %v308
        %1818 = vmatprep.subr.mxu0 %v313
        %1819 = vmatpush1.msra.mxu0 %v312
        %1820 = vmatprep.subr.mxu0 %v317
        %1821 = vmatpush1.msra.mxu0 %v316
        %1822 = vmatprep.subr.mxu0 %v321
        %1823 = vmatpush1.msra.mxu0 %v320
        %1824 = vmatprep.subr.mxu0 %v325
        %1825 = vmatpush1.msra.mxu0 %v324
        %1826 = vmatprep.subr.mxu0 %v329
        %1827 = vmatpush1.msra.mxu0 %v328
        %1828 = vmatprep.subr.mxu0 %v333
        %1829 = vmatpush1.msra.mxu0 %v332
        %1830 = vmatprep.subr.mxu0 %v337
        %1831 = vmatpush1.msra.mxu0 %v336
        %1832 = vmatprep.subr.mxu0 %v341
        %1833 = vmatpush1.msra.mxu0 %v340
        %1834 = vmatprep.subr.mxu0 %v345
        %1835 = vmatpush1.msra.mxu0 %v344
        %1836 = vmatprep.subr.mxu0 %v349
        %1837 = vmatpush1.msra.mxu0 %v348
        %1838 = vmatprep.subr.mxu0 %v353
        %1839 = vmatpush1.msra.mxu0 %v352
        %1840 = vmatprep.subr.mxu0 %v357
        %1841 = vmatpush1.msra.mxu0 %v356
        %1842 = vmatprep.subr.mxu0 0.0
        %1843 = vmatpush1.msra.mxu0 0.0
        %1844 = vmatprep.subr.mxu0 0.0
        %1845 = vmatpush1.msra.mxu0 0.0
        %1846 = vmatprep.subr.mxu0 0.0
        %1847 = vmatpush1.msra.mxu0 0.0
        %1848 = vmatprep.subr.mxu0 0.0
        %1849 = vmatpush1.msra.mxu0 0.0
        %1850 = vmatprep.subr.mxu0 0.0
        %1851 = vmatpush1.msra.mxu0 0.0
        %1852 = vmatprep.subr.mxu0 0.0
        %1853 = vmatpush1.msra.mxu0 0.0
        %1854 = vmatprep.subr.mxu0 0.0
        %1855 = vmatpush1.msra.mxu0 0.0
        %1856 = vmatprep.subr.mxu0 0.0
        %1857 = vmatpush1.msra.mxu0 0.0
        %1858 = vmatprep.subr.mxu0 0.0
        %1859 = vmatpush1.msra.mxu0 0.0
        %1860 = vmatprep.subr.mxu0 0.0
        %1861 = vmatpush1.msra.mxu0 0.0
        %1862 = vmatprep.subr.mxu0 0.0
        %1863 = vmatpush1.msra.mxu0 0.0
        %1864 = vmatprep.subr.mxu0 0.0
        %1865 = vmatpush1.msra.mxu0 0.0
        %1866 = vmatprep.subr.mxu0 0.0
        %1867 = vmatpush1.msra.mxu0 0.0
        %1868 = vmatprep.subr.mxu0 0.0
        %1869 = vmatpush1.msra.mxu0 0.0
        %1870 = vmatprep.subr.mxu0 0.0
        %1871 = vmatpush1.msra.mxu0 0.0
        %1872 = vmatprep.subr.mxu0 0.0
        %1873 = vmatpush1.msra.mxu0 0.0
        %1874 = vmatprep.mubr.f32.mxu0 0.0
        %1875 = vmatmul.mubr.f32.gmra.mrb[0].mxu0 %v1732
        %v1876 = vpop.f32.mrb[0].mxu0
        %v1877 = vadd.f32 0.0, %v1876
        %v1878 = vpop.f32.mrb[0].mxu0
        %v1879 = vadd.f32 0.0, %v1878
        %1880 = vdwg.mxu0
        %v1885 = vcombine.low %v1806, %v1808
        %v1886 = vcombine.low %v1877, %v1879
        %v1888 = vunpack.c.l.s4 1983009808
        %v1889 = vunpack.c.0.s8 %v1888
        %v1890 = vlaneseq
        %v1891 = vshrl.u32 %v1890, 7
        %v1892 = vsub.s32 %v1889, %v1891
        %v1893 = vrot.slane %v1885, %v1892
        %v1895 = vunpack.c.l.s4 1983009808
        %v1896 = vunpack.c.0.s8 %v1895
        %v1897 = vlaneseq
        %v1898 = vshrl.u32 %v1897, 7
        %v1899 = vsub.s32 %v1896, %v1898
        %v1900 = vrot.slane %v1886, %v1899
        %v1901 = vcombine.low %v1893, %v1900
        %v1903 = vadd.f32 %v1738, %v1901
        %v1904 = vmul.f32 %v1903, 0.5
        %v1905 = vtanh.pop %v1904
        %v1906 = vadd.f32 %v1905, 1.0
        %v1907 = vmul.f32 %v1906, 0.5
        %v1909 = vrot.slane %v1903, 2
        %v1911 = vmul.f32 %v1909, 0.5
        %v1912 = vtanh.pop %v1911
        %v1913 = vadd.f32 %v1912, 1.0
        %v1914 = vmul.f32 %v1913, 0.5
        %v1915 = vrot.slane %v1903, 4
        %v1917 = vmul.f32 %v1915, 0.5
        %v1918 = vtanh.pop %v1917
        %v1919 = vadd.f32 %v1918, 1.0
        %v1920 = vmul.f32 %v1919, 0.5
        %v1921 = vrot.slane %v1903, 6
        %v1923 = vmul.f32 %v1921, 0.5
        %v1924 = vtanh.pop %v1923
        %v1925 = vadd.f32 %v1924, 1.0
        %v1926 = vmul.f32 %v1925, 0.5
        %v1927 = vmul.f32 %v1734, %v1914
        %v1928 = vmul.f32 %v1907, %v1920
        %v1929 = vadd.f32 %v1927, %v1928
        %v1930 = vtanh.pop %v1929
        %v1931 = vmul.f32 %v1926, %v1930
        %s1932 = scalar_lea.vmem %s275, 14 [#allocation9]
        %1933 = vst [vmem:[%s1932] sm:$0x3] %v1929
        %1934 = vst [vmem:[#allocation2] sm:$0x3] %v1929
        %1935 = vst [vmem:[#allocation3] sm:$0x3] %v1931
        %s1936 = sand.u32 %s145, 1
        %s1937 = scalar_lea.sflag [#allocation6], %s1936
        %s1938 = sand.u32 %s145, 1
        %s1939 = smul.addr %s1938, 16
        %s1940 = scalar_lea.vmem [#allocation9], %s1939
        // Predicated region
        $region49: #{tpu_custom_call.1} parent=35 // pred_check
          %p1941 = pneg %p155
        $region50: #{tpu_custom_call.1} parent=35 // pred_check_branch
          %1943 = sbr.rel (%p1941) target = $region52
        $region51: #{tpu_custom_call.1} parent=35 // pred_region
          %s1944 = smul.u32 8, %s27
          %s1946 = ssub.s32 256, 256
          %1947 = vsyncadd %s1937, %s1946
          %s1948 = sadd.s32 %s26, %s1944
          %s1949 = smul.addr %s1948, 32
          %s1950 = scalar_lea.hbm %s4, %s1949
          %s1951 = sshll.u32 %s1940, 4
          %s1952 = int_to_ptr.vmem [resolvable:$true] %s1951
          %1957 = dma.vmem_to_hbm [thread:$0]  %s1952, 256, %s1950, %s1937, 32, 32, 2
        $region52: #{tpu_custom_call.1} parent=35 // pred_fallthru
          _
      $region36: #{tpu_custom_call.1} parent=5 // pred_fallthru
        _
      %p1958 = scmp.le.s32.totalorder 2, %s17
      // Predicated region
      $region53: #{tpu_custom_call.1} parent=5 // pred_check
        %p1959 = pneg %p1958
      $region54: #{tpu_custom_call.1} parent=5 // pred_check_branch
        %1961 = sbr.rel (%p1959) target = $region56
      $region55: #{tpu_custom_call.1} parent=5 // pred_region
        %s1962 = ssub.s32 %s17, 2
        // Predicated region
        $region57: #{tpu_custom_call.1} parent=55 // pred_check
          %p1963 = pneg %p161
        $region58: #{tpu_custom_call.1} parent=55 // pred_check_branch
          %1965 = sbr.rel (%p1963) target = $region60
        $region59: #{tpu_custom_call.1} parent=55 // pred_region
          %s1966 = sand.u32 %s146, 1
          %s1967 = scalar_lea.sflag [#allocation6], %s1966
          %s1968 = sand.u32 %s146, 1
          %s1969 = smul.addr %s1968, 16
          %s1970 = scalar_lea.vmem [#allocation9], %s1969
          %1971 = dma.done %s1967, 256
        $region60: #{tpu_custom_call.1} parent=55 // pred_fallthru
          _
      $region56: #{tpu_custom_call.1} parent=5 // pred_fallthru
        _
    $region6: #{tpu_custom_call.1} parent=1 // loop_footer
      %s21 = sadd.s32 1, %s17
    $region7: #{tpu_custom_call.1} parent=1 // loop_footer_branch
      %16 = sbr.rel target = $region3
    $region8: #{tpu_custom_call.1} parent=1 // loop_exit
      _
    %1972 = vsyncpa [#allocation5], 1
    %s1973 = scalar_lea.sflag [#allocation5], 1
    %1974 = vsyncpa %s1973, 1
    %1975 = vsyncpa [#allocation8], 1
    %1976 = vsyncpa [#allocation6], 1
    %s1977 = scalar_lea.sflag [#allocation6], 1
    %1978 = vsyncpa %s1977, 1

</llo_original>
